<compile_context>
chip_gen: v5e
topology: v5e:2x2
jax: 0.10.0
libtpu: 0.0.40
codegen_flags: <defaults>
</compile_context>

<pallas_src>
import jax
import jax.numpy as jnp
import numpy as np
from jax.experimental import pallas as pl
from jax.experimental.pallas import tpu as pltpu

EPS = 1e-5      # PyTorch GroupNorm default eps
GROUPS = 8


# ----------------------------- in-kernel helpers ------------------------------------

def _group_norm(x, gmat, gmat_t, gamma, beta):
    """GroupNorm over (C//G, L) per group for a single sample.
    x:(C,L) f32, gmat:(G,C), gmat_t:(C,G), gamma/beta:(C,1).
    Group statistics are gathered with small MXU matmuls (one-hot group-membership
    matrices) to avoid sublane reshapes.  Variance uses a centered (two-pass)
    formulation for numerical robustness."""
    C, L = x.shape
    G = gmat.shape[0]
    inv_n = 1.0 / float((C // G) * L)

    gsum = jnp.dot(gmat, x, preferred_element_type=jnp.float32)            # (G, L)
    mean_g = jnp.sum(gsum, axis=1, keepdims=True) * inv_n                  # (G, 1)
    mean_c = jnp.dot(gmat_t, mean_g, preferred_element_type=jnp.float32)   # (C, 1)
    xc = x - mean_c
    gsq = jnp.dot(gmat, xc * xc, preferred_element_type=jnp.float32)       # (G, L)
    var_g = jnp.sum(gsq, axis=1, keepdims=True) * inv_n                    # (G, 1) biased
    var_c = jnp.dot(gmat_t, var_g, preferred_element_type=jnp.float32)     # (C, 1)
    inv = jax.lax.rsqrt(var_c + EPS)
    return xc * (inv * gamma) + beta


def _conv1d_k3(x, w_flat, b, keep_first, keep_last):
    """Conv1d kernel=3, padding=1, as ONE fused MXU matmul.
    x:(Cin,L), w_flat:(Cout, 3*Cin) with column blocks [tap k=0 | k=1 | k=2]
    (tap k multiplies x[:, l+k-1]), b:(Cout,1).
    Shifted views come from pltpu.roll (XLU slot) + hoisted boundary masks (one VPU
    multiply each) instead of zero-pad concatenates.
    NOTE: on v6e/v7x these matmuls could optionally use bf16 operands with f32
    accumulation for ~2x MXU throughput; kept f32 here for exact parity."""
    C, L = x.shape
    xr = pltpu.roll(x, shift=1, axis=1) * keep_first        # col l <- x[l-1], col 0   = 0
    xl = pltpu.roll(x, shift=L - 1, axis=1) * keep_last     # col l <- x[l+1], col L-1 = 0
    x_stack = jnp.concatenate([xr, x, xl], axis=0)          # (3*Cin, L) sublane stack
    return jnp.dot(w_flat, x_stack, preferred_element_type=jnp.float32) + b


# ----------------------------------- kernel -----------------------------------------

def _make_kernel(batch_block, has_shortcut):
    def kernel(x_ref, t_ref,
               gmat1_ref, gmat1t_ref, gn1w_ref, gn1b_ref, w1_ref, b1_ref,
               gmat2_ref, gmat2t_ref, gn2w_ref, gn2b_ref, w2_ref, b2_ref,
               *refs):
        if has_shortcut:
            scw_ref, scb_ref, out_ref = refs
        else:
            (out_ref,) = refs

        L = x_ref.shape[-1]
        # Boundary masks for the zero-padded k=3 conv — hoisted: computed once per
        # grid step, reused by both convs and every sample in the batch block.
        lane = jax.lax.broadcasted_iota(jnp.int32, (1, L), 1)
        keep_first = (lane > 0).astype(jnp.float32)
        keep_last = (lane < L - 1).astype(jnp.float32)

        gmat1, gmat1t = gmat1_ref[...], gmat1t_ref[...]
        gn1w, gn1b = gn1w_ref[...], gn1b_ref[...]
        w1, b1 = w1_ref[...], b1_ref[...]
        gmat2, gmat2t = gmat2_ref[...], gmat2t_ref[...]
        gn2w, gn2b = gn2w_ref[...], gn2b_ref[...]
        w2, b2 = w2_ref[...], b2_ref[...]
        if has_shortcut:
            scw, scb = scw_ref[...], scb_ref[...]

        # Static (unrolled) per-sample loop — GroupNorm statistics are per-sample.
        for i in range(batch_block):
            x = x_ref[i]                                      # (Cin, L)

            # ---- block1: GroupNorm -> SiLU -> Conv1d(k3, pad1) ----
            h = _group_norm(x, gmat1, gmat1t, gn1w, gn1b)
            h = jax.nn.silu(h)
            h = _conv1d_k3(h, w1, b1, keep_first, keep_last)  # (Cout, L)

            # ---- time embedding (Linear hoisted to wrapper), broadcast over length ----
            h = h + t_ref[i]                                  # (Cout, 1) column

            # ---- block2: GroupNorm -> SiLU -> Dropout -> Conv1d(k3, pad1) ----
            h = _group_norm(h, gmat2, gmat2t, gn2w, gn2b)
            h = jax.nn.silu(h)
            # TODO(synk): nn.Dropout(p=0.1) is identity here (eval mode); training-mode
            # masking would use pltpu.prng_seed/prng_random_bits per (sample, step).
            h = _conv1d_k3(h, w2, b2, keep_first, keep_last)  # (Cout, L)

            # ---- shortcut ----
            if has_shortcut:          # 1x1 conv (Cin != Cout)
                sc = jnp.dot(scw, x, preferred_element_type=jnp.float32) + scb
            else:                     # nn.Identity: skip the MXU matmul entirely
                sc = x
            out_ref[i] = (h + sc).astype(out_ref.dtype)

    return kernel


# ----------------------------------- wrapper ----------------------------------------

def residual_block(x, time_emb, params, *, batch_block=1):
    """Forward pass matching ResidualBlock.forward.  `params` use torch layouts
    (see init_params).  `batch_block` samples are processed per grid step."""
    B, Cin, L = x.shape
    Cout = params["conv1_w"].shape[0]
    if B % batch_block != 0:
        raise ValueError("batch_block must divide B")
    has_shortcut = "sc_w" in params
    f32 = jnp.float32

    # ------------- one-time XLA-side preprocessing (outside the kernel) -------------
    # Time-embedding Linear hoisted out of the kernel -> (B, Cout, 1), streamed per step.
    t_proj = (time_emb.astype(f32) @ params["tm_w"].T.astype(f32)
              + params["tm_b"].astype(f32)[None, :])[..., None]

    def flatten_conv_w(w):   # (Cout, Cin, 3) torch layout -> (Cout, 3*Cin), tap-major cols
        co, ci, k = w.shape
        return jnp.transpose(w, (0, 2, 1)).reshape(co, k * ci).astype(f32)

    def col(v):              # (C,) -> (C, 1)
        return v.reshape(-1, 1).astype(f32)

    def group_matrix(C, G=GROUPS):
        gid = jnp.arange(C) // (C // G)
        return (gid[None, :] == jnp.arange(G)[:, None]).astype(f32)       # (G, C)

    gmat1 = group_matrix(Cin)
    gmat2 = group_matrix(Cout)

    param_arrays = [
        gmat1, gmat1.T, col(params["gn1_w"]), col(params["gn1_b"]),
        flatten_conv_w(params["conv1_w"]), col(params["conv1_b"]),
        gmat2, gmat2.T, col(params["gn2_w"]), col(params["gn2_b"]),
        flatten_conv_w(params["conv2_w"]), col(params["conv2_b"]),
    ]
    if has_shortcut:
        param_arrays += [params["sc_w"][:, :, 0].astype(f32), col(params["sc_b"])]

    def full_spec(a):
        return pl.BlockSpec(a.shape, lambda b, _n=a.ndim: (0,) * _n)

    in_specs = [
        pl.BlockSpec((batch_block, Cin, L), lambda b: (b, 0, 0)),    # x slab
        pl.BlockSpec((batch_block, Cout, 1), lambda b: (b, 0, 0)),   # per-sample time column
    ] + [full_spec(a) for a in param_arrays]
    out_spec = pl.BlockSpec((batch_block, Cout, L), lambda b: (b, 0, 0))

    # TODO(synk): at real U-Net sizes (C up to 512, L in the thousands) tile L with a
    # 1-element halo instead of loading the full (C, L) slab per step (v7x 64 MiB VMEM).
    return pl.pallas_call(
        _make_kernel(batch_block, has_shortcut),
        out_shape=jax.ShapeDtypeStruct((B, Cout, L), f32),
        grid_spec=pltpu.PrefetchScalarGridSpec(
            num_scalar_prefetch=0,
            grid=(B // batch_block,),
            in_specs=in_specs,
            out_specs=out_spec,
        ),
        compiler_params=pltpu.CompilerParams(
            dimension_semantics=("parallel",),
            vmem_limit_bytes=32 * 1024 * 1024,  # avoid the v5e 16 MiB scoped default at larger shapes
        ),
    )(x.astype(f32), t_proj, *param_arrays)


# ------------------------------ parameter creation ----------------------------------

def init_params(key, Cin, Cout, T):
    """Parameters in torch-like layouts (Conv1d weight = (Cout, Cin, K))."""
    ks = jax.random.split(key, 12)
    f32 = jnp.float32
    p = {
        "gn1_w": (1.0 + 0.1 * jax.random.normal(ks[0], (Cin,))).astype(f32),
        "gn1_b": (0.1 * jax.random.normal(ks[1], (Cin,))).astype(f32),
        "conv1_w": (0.2 * jax.random.normal(ks[2], (Cout, Cin, 3))).astype(f32),
        "conv1_b": (0.1 * jax.random.normal(ks[3], (Cout,))).astype(f32),
        "tm_w": (0.2 * jax.random.normal(ks[4], (Cout, T))).astype(f32),
        "tm_b": (0.1 * jax.random.normal(ks[5], (Cout,))).astype(f32),
        "gn2_w": (1.0 + 0.1 * jax.random.normal(ks[6], (Cout,))).astype(f32),
        "gn2_b": (0.1 * jax.random.normal(ks[7], (Cout,))).astype(f32),
        "conv2_w": (0.2 * jax.random.normal(ks[8], (Cout, Cout, 3))).astype(f32),
        "conv2_b": (0.1 * jax.random.normal(ks[9], (Cout,))).astype(f32),
    }
    if Cin != Cout:  # nn.Conv1d(Cin, Cout, 1) shortcut; otherwise nn.Identity
        p["sc_w"] = (0.2 * jax.random.normal(ks[10], (Cout, Cin, 1))).astype(f32)
        p["sc_b"] = (0.1 * jax.random.normal(ks[11], (Cout,))).astype(f32)
    return p


# ------------------------------ pure-JAX reference ----------------------------------

def ref_forward(x, time_emb, p, G=GROUPS):
    def gn(x, gamma, beta):
        B, C, L = x.shape
        xg = x.reshape(B, G, C // G, L)
        mean = xg.mean(axis=(2, 3), keepdims=True)
        var = xg.var(axis=(2, 3), keepdims=True)
        xn = ((xg - mean) / jnp.sqrt(var + EPS)).reshape(B, C, L)
        return xn * gamma.reshape(1, C, 1) + beta.reshape(1, C, 1)

    def conv(x, w, b, pad):
        out = jax.lax.conv_general_dilated(
            x, w, window_strides=(1,), padding=[pad],
            dimension_numbers=("NCH", "OIH", "NCH"))
        return out + b.reshape(1, -1, 1)

    h = gn(x, p["gn1_w"], p["gn1_b"])
    h = jax.nn.silu(h)
    h = conv(h, p["conv1_w"], p["conv1_b"], (1, 1))
    t = time_emb @ p["tm_w"].T + p["tm_b"][None, :]
    h = h + t[:, :, None]
    h = gn(h, p["gn2_w"], p["gn2_b"])
    h = jax.nn.silu(h)
    h = conv(h, p["conv2_w"], p["conv2_b"], (1, 1))
    if "sc_w" in p:
        sc = conv(x, p["sc_w"], p["sc_b"], (0, 0))
    else:
        sc = x
    return h + sc


# ---------------------------------------- main --------------------------------------

if __name__ == "__main__":
    key = jax.random.PRNGKey(0)

    # Config A: projection shortcut (Cin != Cout), one sample per grid step.
    # Config B: identity shortcut (Cin == Cout), batch-blocked grid (batch_block=2).
    configs = [
        dict(B=2, Cin=8, Cout=16, T=32, L=128, batch_block=1),
        dict(B=2, Cin=16, Cout=16, T=32, L=128, batch_block=2),
    ]
    for cfg in configs:
        kx, kt, kp, key = jax.random.split(key, 4)
        x = jax.random.normal(kx, (cfg["B"], cfg["Cin"], cfg["L"]), jnp.float32)
        te = jax.random.normal(kt, (cfg["B"], cfg["T"]), jnp.float32)
        params = init_params(kp, cfg["Cin"], cfg["Cout"], cfg["T"])

        out = jax.block_until_ready(
            residual_block(x, te, params, batch_block=cfg["batch_block"]))
        ref = jax.block_until_ready(ref_forward(x, te, params))
        np.testing.assert_allclose(np.asarray(out), np.asarray(ref),
                                   rtol=2e-3, atol=2e-3)

    print("KERNEL_OK")
</pallas_src>

<mosaic_0001>
module attributes {stable_mosaic.version = 11 : i64} {
  func.func @kernel(%arg0: i32, %arg1: memref<1x8x128xf32, #tpu.memory_space<vmem>>, %arg2: memref<1x16x1xf32, #tpu.memory_space<vmem>>, %arg3: memref<8x8xf32, #tpu.memory_space<vmem>>, %arg4: memref<8x8xf32, #tpu.memory_space<vmem>>, %arg5: memref<8x1xf32, #tpu.memory_space<vmem>>, %arg6: memref<8x1xf32, #tpu.memory_space<vmem>>, %arg7: memref<16x24xf32, #tpu.memory_space<vmem>>, %arg8: memref<16x1xf32, #tpu.memory_space<vmem>>, %arg9: memref<8x16xf32, #tpu.memory_space<vmem>>, %arg10: memref<16x8xf32, #tpu.memory_space<vmem>>, %arg11: memref<16x1xf32, #tpu.memory_space<vmem>>, %arg12: memref<16x1xf32, #tpu.memory_space<vmem>>, %arg13: memref<16x48xf32, #tpu.memory_space<vmem>>, %arg14: memref<16x1xf32, #tpu.memory_space<vmem>>, %arg15: memref<16x8xf32, #tpu.memory_space<vmem>>, %arg16: memref<16x1xf32, #tpu.memory_space<vmem>>, %arg17: memref<1x16x128xf32, #tpu.memory_space<vmem>>) attributes {dimension_semantics = [#tpu.dimension_semantics<parallel>], iteration_bounds = array<i64: 2>, scalar_prefetch = 0 : i64, scratch_operands = 0 : i64, tpu.core_type = #tpu.core_type<tc>, window_params = [{transform_indices = @transform_0, window_bounds = array<i64: 1, 8, 128>}, {transform_indices = @transform_1, window_bounds = array<i64: 1, 16, 1>}, {pipeline_mode = #tpu.pipeline_mode<synchronous>, transform_indices = @transform_2, window_bounds = array<i64: 8, 8>}, {pipeline_mode = #tpu.pipeline_mode<synchronous>, transform_indices = @transform_3, window_bounds = array<i64: 8, 8>}, {pipeline_mode = #tpu.pipeline_mode<synchronous>, transform_indices = @transform_4, window_bounds = array<i64: 8, 1>}, {pipeline_mode = #tpu.pipeline_mode<synchronous>, transform_indices = @transform_5, window_bounds = array<i64: 8, 1>}, {pipeline_mode = #tpu.pipeline_mode<synchronous>, transform_indices = @transform_6, window_bounds = array<i64: 16, 24>}, {pipeline_mode = #tpu.pipeline_mode<synchronous>, transform_indices = @transform_7, window_bounds = array<i64: 16, 1>}, {pipeline_mode = #tpu.pipeline_mode<synchronous>, transform_indices = @transform_8, window_bounds = array<i64: 8, 16>}, {pipeline_mode = #tpu.pipeline_mode<synchronous>, transform_indices = @transform_9, window_bounds = array<i64: 16, 8>}, {pipeline_mode = #tpu.pipeline_mode<synchronous>, transform_indices = @transform_10, window_bounds = array<i64: 16, 1>}, {pipeline_mode = #tpu.pipeline_mode<synchronous>, transform_indices = @transform_11, window_bounds = array<i64: 16, 1>}, {pipeline_mode = #tpu.pipeline_mode<synchronous>, transform_indices = @transform_12, window_bounds = array<i64: 16, 48>}, {pipeline_mode = #tpu.pipeline_mode<synchronous>, transform_indices = @transform_13, window_bounds = array<i64: 16, 1>}, {pipeline_mode = #tpu.pipeline_mode<synchronous>, transform_indices = @transform_14, window_bounds = array<i64: 16, 8>}, {pipeline_mode = #tpu.pipeline_mode<synchronous>, transform_indices = @transform_15, window_bounds = array<i64: 16, 1>}, {transform_indices = @transform_16, window_bounds = array<i64: 1, 16, 128>}]} {
    %0 = tpu.iota {dimensions = array<i32: 1>} : vector<1x128xi32>
    %c0_i32 = arith.constant 0 : i32
    %1 = vector.broadcast %c0_i32 : i32 to vector<1x128xi32>
    %2 = arith.cmpi sgt, %0, %1 : vector<1x128xi32>
    %3 = arith.extui %2 : vector<1x128xi1> to vector<1x128xi32>
    %4 = arith.sitofp %3 : vector<1x128xi32> to vector<1x128xf32>
    %c127_i32 = arith.constant 127 : i32
    %5 = vector.broadcast %c127_i32 : i32 to vector<1x128xi32>
    %6 = arith.cmpi slt, %0, %5 : vector<1x128xi32>
    %7 = arith.extui %6 : vector<1x128xi1> to vector<1x128xi32>
    %8 = arith.sitofp %7 : vector<1x128xi32> to vector<1x128xf32>
    %c0 = arith.constant 0 : index
    %c0_0 = arith.constant 0 : index
    %9 = vector.load %arg3[%c0, %c0_0] : memref<8x8xf32, #tpu.memory_space<vmem>>, vector<8x8xf32>
    %c0_1 = arith.constant 0 : index
    %c0_2 = arith.constant 0 : index
    %10 = vector.load %arg4[%c0_1, %c0_2] : memref<8x8xf32, #tpu.memory_space<vmem>>, vector<8x8xf32>
    %c0_3 = arith.constant 0 : index
    %c0_4 = arith.constant 0 : index
    %11 = vector.load %arg5[%c0_3, %c0_4] : memref<8x1xf32, #tpu.memory_space<vmem>>, vector<8x1xf32>
    %c0_5 = arith.constant 0 : index
    %c0_6 = arith.constant 0 : index
    %12 = vector.load %arg6[%c0_5, %c0_6] : memref<8x1xf32, #tpu.memory_space<vmem>>, vector<8x1xf32>
    %c0_7 = arith.constant 0 : index
    %c0_8 = arith.constant 0 : index
    %13 = vector.load %arg7[%c0_7, %c0_8] : memref<16x24xf32, #tpu.memory_space<vmem>>, vector<16x24xf32>
    %c0_9 = arith.constant 0 : index
    %c0_10 = arith.constant 0 : index
    %14 = vector.load %arg8[%c0_9, %c0_10] : memref<16x1xf32, #tpu.memory_space<vmem>>, vector<16x1xf32>
    %c0_11 = arith.constant 0 : index
    %c0_12 = arith.constant 0 : index
    %15 = vector.load %arg9[%c0_11, %c0_12] : memref<8x16xf32, #tpu.memory_space<vmem>>, vector<8x16xf32>
    %c0_13 = arith.constant 0 : index
    %c0_14 = arith.constant 0 : index
    %16 = vector.load %arg10[%c0_13, %c0_14] : memref<16x8xf32, #tpu.memory_space<vmem>>, vector<16x8xf32>
    %c0_15 = arith.constant 0 : index
    %c0_16 = arith.constant 0 : index
    %17 = vector.load %arg11[%c0_15, %c0_16] : memref<16x1xf32, #tpu.memory_space<vmem>>, vector<16x1xf32>
    %c0_17 = arith.constant 0 : index
    %c0_18 = arith.constant 0 : index
    %18 = vector.load %arg12[%c0_17, %c0_18] : memref<16x1xf32, #tpu.memory_space<vmem>>, vector<16x1xf32>
    %c0_19 = arith.constant 0 : index
    %c0_20 = arith.constant 0 : index
    %19 = vector.load %arg13[%c0_19, %c0_20] : memref<16x48xf32, #tpu.memory_space<vmem>>, vector<16x48xf32>
    %c0_21 = arith.constant 0 : index
    %c0_22 = arith.constant 0 : index
    %20 = vector.load %arg14[%c0_21, %c0_22] : memref<16x1xf32, #tpu.memory_space<vmem>>, vector<16x1xf32>
    %c0_23 = arith.constant 0 : index
    %c0_24 = arith.constant 0 : index
    %21 = vector.load %arg15[%c0_23, %c0_24] : memref<16x8xf32, #tpu.memory_space<vmem>>, vector<16x8xf32>
    %c0_25 = arith.constant 0 : index
    %c0_26 = arith.constant 0 : index
    %22 = vector.load %arg16[%c0_25, %c0_26] : memref<16x1xf32, #tpu.memory_space<vmem>>, vector<16x1xf32>
    %c0_27 = arith.constant 0 : index
    %c0_28 = arith.constant 0 : index
    %c0_29 = arith.constant 0 : index
    %23 = vector.load %arg1[%c0_27, %c0_28, %c0_29] : memref<1x8x128xf32, #tpu.memory_space<vmem>>, vector<1x8x128xf32>
    %24 = vector.shape_cast %23 : vector<1x8x128xf32> to vector<8x128xf32>
    %cst = arith.constant dense<0.000000e+00> : vector<8x128xf32>
    %25 = tpu.matmul %9, %24, %cst {dimension_numbers = #tpu.dot_dimension_numbers<[1], [0], [0], [1], [0, 0, 1, 1], [], []>} : vector<8x8xf32>, vector<8x128xf32>, vector<8x128xf32> -> vector<8x128xf32>
    %cst_30 = arith.constant dense<0.000000e+00> : vector<8xf32>
    %26 = vector.multi_reduction <add>, %25, %cst_30 [1] : vector<8x128xf32> to vector<8xf32>
    %27 = vector.shape_cast %26 : vector<8xf32> to vector<8x1xf32>
    %cst_31 = arith.constant 7.812500e-03 : f32
    %28 = vector.broadcast %cst_31 : f32 to vector<8x1xf32>
    %29 = arith.mulf %27, %28 : vector<8x1xf32>
    %cst_32 = arith.constant dense<0.000000e+00> : vector<8x1xf32>
    %30 = tpu.matmul %10, %29, %cst_32 {dimension_numbers = #tpu.dot_dimension_numbers<[1], [0], [0], [1], [0, 0, 1, 1], [], []>} : vector<8x8xf32>, vector<8x1xf32>, vector<8x1xf32> -> vector<8x1xf32>
    %31 = vector.broadcast %30 : vector<8x1xf32> to vector<8x128xf32>
    %32 = arith.subf %24, %31 : vector<8x128xf32>
    %33 = arith.mulf %32, %32 : vector<8x128xf32>
    %cst_33 = arith.constant dense<0.000000e+00> : vector<8x128xf32>
    %34 = tpu.matmul %9, %33, %cst_33 {dimension_numbers = #tpu.dot_dimension_numbers<[1], [0], [0], [1], [0, 0, 1, 1], [], []>} : vector<8x8xf32>, vector<8x128xf32>, vector<8x128xf32> -> vector<8x128xf32>
    %cst_34 = arith.constant dense<0.000000e+00> : vector<8xf32>
    %35 = vector.multi_reduction <add>, %34, %cst_34 [1] : vector<8x128xf32> to vector<8xf32>
    %36 = vector.shape_cast %35 : vector<8xf32> to vector<8x1xf32>
    %cst_35 = arith.constant 7.812500e-03 : f32
    %37 = vector.broadcast %cst_35 : f32 to vector<8x1xf32>
    %38 = arith.mulf %36, %37 : vector<8x1xf32>
    %cst_36 = arith.constant dense<0.000000e+00> : vector<8x1xf32>
    %39 = tpu.matmul %10, %38, %cst_36 {dimension_numbers = #tpu.dot_dimension_numbers<[1], [0], [0], [1], [0, 0, 1, 1], [], []>} : vector<8x8xf32>, vector<8x1xf32>, vector<8x1xf32> -> vector<8x1xf32>
    %cst_37 = arith.constant 9.99999974E-6 : f32
    %40 = vector.broadcast %cst_37 : f32 to vector<8x1xf32>
    %41 = arith.addf %39, %40 : vector<8x1xf32>
    %42 = math.rsqrt %41 : vector<8x1xf32>
    %43 = arith.mulf %42, %11 : vector<8x1xf32>
    %44 = vector.broadcast %43 : vector<8x1xf32> to vector<8x128xf32>
    %45 = arith.mulf %32, %44 : vector<8x128xf32>
    %46 = vector.broadcast %12 : vector<8x1xf32> to vector<8x128xf32>
    %47 = arith.addf %45, %46 : vector<8x128xf32>
    %48 = arith.negf %47 : vector<8x128xf32>
    %49 = math.exp %48 : vector<8x128xf32>
    %cst_38 = arith.constant 1.000000e+00 : f32
    %50 = vector.broadcast %cst_38 : f32 to vector<8x128xf32>
    %51 = arith.addf %50, %49 : vector<8x128xf32>
    %52 = arith.divf %50, %51 : vector<8x128xf32>
    %53 = arith.mulf %47, %52 : vector<8x128xf32>
    %c1_i32 = arith.constant 1 : i32
    %54 = tpu.dynamic_rotate %53 by %c1_i32 dim 1 : vector<8x128xf32>, i32 -> vector<8x128xf32>
    %55 = vector.broadcast %4 : vector<1x128xf32> to vector<8x128xf32>
    %56 = arith.mulf %54, %55 : vector<8x128xf32>
    %c127_i32_39 = arith.constant 127 : i32
    %57 = tpu.dynamic_rotate %53 by %c127_i32_39 dim 1 : vector<8x128xf32>, i32 -> vector<8x128xf32>
    %58 = vector.broadcast %8 : vector<1x128xf32> to vector<8x128xf32>
    %59 = arith.mulf %57, %58 : vector<8x128xf32>
    %60 = tpu.concatenate %56, %53, %59 in 0 : vector<8x128xf32>, vector<8x128xf32>, vector<8x128xf32> -> vector<24x128xf32>
    %cst_40 = arith.constant dense<0.000000e+00> : vector<16x128xf32>
    %61 = tpu.matmul %13, %60, %cst_40 {dimension_numbers = #tpu.dot_dimension_numbers<[1], [0], [0], [1], [0, 0, 1, 1], [], []>} : vector<16x24xf32>, vector<24x128xf32>, vector<16x128xf32> -> vector<16x128xf32>
    %62 = vector.broadcast %14 : vector<16x1xf32> to vector<16x128xf32>
    %63 = arith.addf %61, %62 : vector<16x128xf32>
    %c0_41 = arith.constant 0 : index
    %c0_42 = arith.constant 0 : index
    %c0_43 = arith.constant 0 : index
    %64 = vector.load %arg2[%c0_41, %c0_42, %c0_43] : memref<1x16x1xf32, #tpu.memory_space<vmem>>, vector<1x16x1xf32>
    %65 = vector.shape_cast %64 : vector<1x16x1xf32> to vector<16x1xf32>
    %66 = vector.broadcast %65 : vector<16x1xf32> to vector<16x128xf32>
    %67 = arith.addf %63, %66 : vector<16x128xf32>
    %cst_44 = arith.constant dense<0.000000e+00> : vector<8x128xf32>
    %68 = tpu.matmul %15, %67, %cst_44 {dimension_numbers = #tpu.dot_dimension_numbers<[1], [0], [0], [1], [0, 0, 1, 1], [], []>} : vector<8x16xf32>, vector<16x128xf32>, vector<8x128xf32> -> vector<8x128xf32>
    %cst_45 = arith.constant dense<0.000000e+00> : vector<8xf32>
    %69 = vector.multi_reduction <add>, %68, %cst_45 [1] : vector<8x128xf32> to vector<8xf32>
    %70 = vector.shape_cast %69 : vector<8xf32> to vector<8x1xf32>
    %cst_46 = arith.constant 3.906250e-03 : f32
    %71 = vector.broadcast %cst_46 : f32 to vector<8x1xf32>
    %72 = arith.mulf %70, %71 : vector<8x1xf32>
    %cst_47 = arith.constant dense<0.000000e+00> : vector<16x1xf32>
    %73 = tpu.matmul %16, %72, %cst_47 {dimension_numbers = #tpu.dot_dimension_numbers<[1], [0], [0], [1], [0, 0, 1, 1], [], []>} : vector<16x8xf32>, vector<8x1xf32>, vector<16x1xf32> -> vector<16x1xf32>
    %74 = vector.broadcast %73 : vector<16x1xf32> to vector<16x128xf32>
    %75 = arith.subf %67, %74 : vector<16x128xf32>
    %76 = arith.mulf %75, %75 : vector<16x128xf32>
    %cst_48 = arith.constant dense<0.000000e+00> : vector<8x128xf32>
    %77 = tpu.matmul %15, %76, %cst_48 {dimension_numbers = #tpu.dot_dimension_numbers<[1], [0], [0], [1], [0, 0, 1, 1], [], []>} : vector<8x16xf32>, vector<16x128xf32>, vector<8x128xf32> -> vector<8x128xf32>
    %cst_49 = arith.constant dense<0.000000e+00> : vector<8xf32>
    %78 = vector.multi_reduction <add>, %77, %cst_49 [1] : vector<8x128xf32> to vector<8xf32>
    %79 = vector.shape_cast %78 : vector<8xf32> to vector<8x1xf32>
    %cst_50 = arith.constant 3.906250e-03 : f32
    %80 = vector.broadcast %cst_50 : f32 to vector<8x1xf32>
    %81 = arith.mulf %79, %80 : vector<8x1xf32>
    %cst_51 = arith.constant dense<0.000000e+00> : vector<16x1xf32>
    %82 = tpu.matmul %16, %81, %cst_51 {dimension_numbers = #tpu.dot_dimension_numbers<[1], [0], [0], [1], [0, 0, 1, 1], [], []>} : vector<16x8xf32>, vector<8x1xf32>, vector<16x1xf32> -> vector<16x1xf32>
    %cst_52 = arith.constant 9.99999974E-6 : f32
    %83 = vector.broadcast %cst_52 : f32 to vector<16x1xf32>
    %84 = arith.addf %82, %83 : vector<16x1xf32>
    %85 = math.rsqrt %84 : vector<16x1xf32>
    %86 = arith.mulf %85, %17 : vector<16x1xf32>
    %87 = vector.broadcast %86 : vector<16x1xf32> to vector<16x128xf32>
    %88 = arith.mulf %75, %87 : vector<16x128xf32>
    %89 = vector.broadcast %18 : vector<16x1xf32> to vector<16x128xf32>
    %90 = arith.addf %88, %89 : vector<16x128xf32>
    %91 = arith.negf %90 : vector<16x128xf32>
    %92 = math.exp %91 : vector<16x128xf32>
    %cst_53 = arith.constant 1.000000e+00 : f32
    %93 = vector.broadcast %cst_53 : f32 to vector<16x128xf32>
    %94 = arith.addf %93, %92 : vector<16x128xf32>
    %95 = arith.divf %93, %94 : vector<16x128xf32>
    %96 = arith.mulf %90, %95 : vector<16x128xf32>
    %c1_i32_54 = arith.constant 1 : i32
    %97 = tpu.dynamic_rotate %96 by %c1_i32_54 dim 1 : vector<16x128xf32>, i32 -> vector<16x128xf32>
    %98 = vector.broadcast %4 : vector<1x128xf32> to vector<16x128xf32>
    %99 = arith.mulf %97, %98 : vector<16x128xf32>
    %c127_i32_55 = arith.constant 127 : i32
    %100 = tpu.dynamic_rotate %96 by %c127_i32_55 dim 1 : vector<16x128xf32>, i32 -> vector<16x128xf32>
    %101 = vector.broadcast %8 : vector<1x128xf32> to vector<16x128xf32>
    %102 = arith.mulf %100, %101 : vector<16x128xf32>
    %103 = tpu.concatenate %99, %96, %102 in 0 : vector<16x128xf32>, vector<16x128xf32>, vector<16x128xf32> -> vector<48x128xf32>
    %cst_56 = arith.constant dense<0.000000e+00> : vector<16x128xf32>
    %104 = tpu.matmul %19, %103, %cst_56 {dimension_numbers = #tpu.dot_dimension_numbers<[1], [0], [0], [1], [0, 0, 1, 1], [], []>} : vector<16x48xf32>, vector<48x128xf32>, vector<16x128xf32> -> vector<16x128xf32>
    %105 = vector.broadcast %20 : vector<16x1xf32> to vector<16x128xf32>
    %106 = arith.addf %104, %105 : vector<16x128xf32>
    %cst_57 = arith.constant dense<0.000000e+00> : vector<16x128xf32>
    %107 = tpu.matmul %21, %24, %cst_57 {dimension_numbers = #tpu.dot_dimension_numbers<[1], [0], [0], [1], [0, 0, 1, 1], [], []>} : vector<16x8xf32>, vector<8x128xf32>, vector<16x128xf32> -> vector<16x128xf32>
    %108 = vector.broadcast %22 : vector<16x1xf32> to vector<16x128xf32>
    %109 = arith.addf %107, %108 : vector<16x128xf32>
    %110 = arith.addf %106, %109 : vector<16x128xf32>
    %c0_58 = arith.constant 0 : index
    %c0_59 = arith.constant 0 : index
    %c0_60 = arith.constant 0 : index
    %111 = vector.load %arg17[%c0_58, %c0_59, %c0_60] : memref<1x16x128xf32, #tpu.memory_space<vmem>>, vector<1x16x128xf32>
    %112 = vector.shape_cast %111 : vector<1x16x128xf32> to vector<16x128xf32>
    %113 = vector.shape_cast %110 : vector<16x128xf32> to vector<1x16x128xf32>
    tpu.vector_store %arg17[%c0_58, %c0_59, %c0_60], %113 {strides = array<i32>} : memref<1x16x128xf32, #tpu.memory_space<vmem>>, vector<1x16x128xf32>,
    return
  }
  func.func @transform_0(%arg0: i32) -> (i32, i32, i32) {
    %c0_i32 = arith.constant 0 : i32
    %c0_i32_0 = arith.constant 0 : i32
    %c0_i32_1 = arith.constant 0 : i32
    return %arg0, %c0_i32, %c0_i32_0 : i32, i32, i32
  }
  func.func @transform_1(%arg0: i32) -> (i32, i32, i32) {
    %c0_i32 = arith.constant 0 : i32
    %c0_i32_0 = arith.constant 0 : i32
    %c0_i32_1 = arith.constant 0 : i32
    return %arg0, %c0_i32, %c0_i32_0 : i32, i32, i32
  }
  func.func @transform_2(%arg0: i32) -> (i32, i32) {
    %c0_i32 = arith.constant 0 : i32
    %c0_i32_0 = arith.constant 0 : i32
    %c0_i32_1 = arith.constant 0 : i32
    return %c0_i32, %c0_i32_0 : i32, i32
  }
  func.func @transform_3(%arg0: i32) -> (i32, i32) {
    %c0_i32 = arith.constant 0 : i32
    %c0_i32_0 = arith.constant 0 : i32
    %c0_i32_1 = arith.constant 0 : i32
    return %c0_i32, %c0_i32_0 : i32, i32
  }
  func.func @transform_4(%arg0: i32) -> (i32, i32) {
    %c0_i32 = arith.constant 0 : i32
    %c0_i32_0 = arith.constant 0 : i32
    %c0_i32_1 = arith.constant 0 : i32
    return %c0_i32, %c0_i32_0 : i32, i32
  }
  func.func @transform_5(%arg0: i32) -> (i32, i32) {
    %c0_i32 = arith.constant 0 : i32
    %c0_i32_0 = arith.constant 0 : i32
    %c0_i32_1 = arith.constant 0 : i32
    return %c0_i32, %c0_i32_0 : i32, i32
  }
  func.func @transform_6(%arg0: i32) -> (i32, i32) {
    %c0_i32 = arith.constant 0 : i32
    %c0_i32_0 = arith.constant 0 : i32
    %c0_i32_1 = arith.constant 0 : i32
    return %c0_i32, %c0_i32_0 : i32, i32
  }
  func.func @transform_7(%arg0: i32) -> (i32, i32) {
    %c0_i32 = arith.constant 0 : i32
    %c0_i32_0 = arith.constant 0 : i32
    %c0_i32_1 = arith.constant 0 : i32
    return %c0_i32, %c0_i32_0 : i32, i32
  }
  func.func @transform_8(%arg0: i32) -> (i32, i32) {
    %c0_i32 = arith.constant 0 : i32
    %c0_i32_0 = arith.constant 0 : i32
    %c0_i32_1 = arith.constant 0 : i32
    return %c0_i32, %c0_i32_0 : i32, i32
  }
  func.func @transform_9(%arg0: i32) -> (i32, i32) {
    %c0_i32 = arith.constant 0 : i32
    %c0_i32_0 = arith.constant 0 : i32
    %c0_i32_1 = arith.constant 0 : i32
    return %c0_i32, %c0_i32_0 : i32, i32
  }
  func.func @transform_10(%arg0: i32) -> (i32, i32) {
    %c0_i32 = arith.constant 0 : i32
    %c0_i32_0 = arith.constant 0 : i32
    %c0_i32_1 = arith.constant 0 : i32
    return %c0_i32, %c0_i32_0 : i32, i32
  }
  func.func @transform_11(%arg0: i32) -> (i32, i32) {
    %c0_i32 = arith.constant 0 : i32
    %c0_i32_0 = arith.constant 0 : i32
    %c0_i32_1 = arith.constant 0 : i32
    return %c0_i32, %c0_i32_0 : i32, i32
  }
  func.func @transform_12(%arg0: i32) -> (i32, i32) {
    %c0_i32 = arith.constant 0 : i32
    %c0_i32_0 = arith.constant 0 : i32
    %c0_i32_1 = arith.constant 0 : i32
    return %c0_i32, %c0_i32_0 : i32, i32
  }
  func.func @transform_13(%arg0: i32) -> (i32, i32) {
    %c0_i32 = arith.constant 0 : i32
    %c0_i32_0 = arith.constant 0 : i32
    %c0_i32_1 = arith.constant 0 : i32
    return %c0_i32, %c0_i32_0 : i32, i32
  }
  func.func @transform_14(%arg0: i32) -> (i32, i32) {
    %c0_i32 = arith.constant 0 : i32
    %c0_i32_0 = arith.constant 0 : i32
    %c0_i32_1 = arith.constant 0 : i32
    return %c0_i32, %c0_i32_0 : i32, i32
  }
  func.func @transform_15(%arg0: i32) -> (i32, i32) {
    %c0_i32 = arith.constant 0 : i32
    %c0_i32_0 = arith.constant 0 : i32
    %c0_i32_1 = arith.constant 0 : i32
    return %c0_i32, %c0_i32_0 : i32, i32
  }
  func.func @transform_16(%arg0: i32) -> (i32, i32, i32) {
    %c0_i32 = arith.constant 0 : i32
    %c0_i32_0 = arith.constant 0 : i32
    %c0_i32_1 = arith.constant 0 : i32
    return %arg0, %c0_i32, %c0_i32_0 : i32, i32, i32
  }
}

</mosaic_0001>

<llo_original>
// kernel: tpu_custom_call.1
$region0: #{tpu_custom_call.1}
  #allocation0 [shape = 'u32[]', space=smem, size = 0x4, offset = 0x4, fixed_abs, tag = 'smem constant byte address 0x4 - core index']
  #allocation1 [shape = 'u32[72,128]{1,0:T(1,128)}', space=vmem, size = 0x9000, scoped, tag = 'internal scratch']
  %s0 = inlined_call_operand.vmem [shape: f32[2,8,128], index: 0, kind: input, shape index: {}]
  %s1 = inlined_call_operand.vmem [shape: f32[2,16,1], index: 1, kind: input, shape index: {}]
  %s2 = inlined_call_operand.vmem [shape: f32[8,8], index: 2, kind: input, shape index: {}]
  %s3 = inlined_call_operand.vmem [shape: f32[8,8], index: 3, kind: input, shape index: {}]
  %s4 = inlined_call_operand.vmem [shape: f32[8,1], index: 4, kind: input, shape index: {}]
  %s5 = inlined_call_operand.vmem [shape: f32[8,1], index: 5, kind: input, shape index: {}]
  %s6 = inlined_call_operand.vmem [shape: f32[16,24], index: 6, kind: input, shape index: {}]
  %s7 = inlined_call_operand.vmem [shape: f32[16,1], index: 7, kind: input, shape index: {}]
  %s8 = inlined_call_operand.vmem [shape: f32[8,16], index: 8, kind: input, shape index: {}]
  %s9 = inlined_call_operand.vmem [shape: f32[16,8], index: 9, kind: input, shape index: {}]
  %s10 = inlined_call_operand.vmem [shape: f32[16,1], index: 10, kind: input, shape index: {}]
  %s11 = inlined_call_operand.vmem [shape: f32[16,1], index: 11, kind: input, shape index: {}]
  %s12 = inlined_call_operand.vmem [shape: f32[16,48], index: 12, kind: input, shape index: {}]
  %s13 = inlined_call_operand.vmem [shape: f32[16,1], index: 13, kind: input, shape index: {}]
  %s14 = inlined_call_operand.vmem [shape: f32[16,8], index: 14, kind: input, shape index: {}]
  %s15 = inlined_call_operand.vmem [shape: f32[16,1], index: 15, kind: input, shape index: {}]
  %s16 = inlined_call_operand.hbm [shape: f32[2,16,128], index: 16, kind: output, shape index: {}]
  %s17 = sld [smem:[#allocation0]]
  $region97: #{tpu_custom_call.1} parent=0
    _
  %s19 = ssub.s32 1, %s17
  %s20 = scalar_select 0, %s19, %s17
  $region1: #{tpu_custom_call.1} parent=0
    #allocation2 [shape = 'u8[16384]{0}', space=vmem, size = 0x4000, scoped, tag = 'output window, operand 0']
    #allocation3 [shape = 's32[2]{0}', space=sflag, size = 0x8, scoped, tag = 'scoped memory for tpu_custom_call.1']
    %21 = vsyncpa [#allocation3], 0
    %s22 = scalar_lea.sflag [#allocation3], 1
    %23 = vsyncpa %s22, 0
    loop: start=0, step=1, limit=4
    $region2: #{tpu_custom_call.1} parent=1 // loop_pre_header
      _
    $region3: #{tpu_custom_call.1} parent=1 // loop_header
      %s25 = sphi 0, %s29
      %p26 = scmp.ge.s32.totalorder %s25, 4
      %s35 = sphi 0, %s37
      %s38 = sphi 0, %s35
      %s39 = sphi 0, %s38
      %s55 = sphi 0, %s39
      %s61 = sphi 0, %s63
      %s64 = sphi 0, %s61
      %s65 = sphi 0, %s64
      %s81 = sphi 0, %s65
      %s85 = sphi 0, %s85
      %s87 = sphi 0, %s85
      %s88 = sphi 0, %s87
      %s102 = sphi 0, %s88
      %s106 = sphi 0, %s106
      %s108 = sphi 0, %s106
      %s109 = sphi 0, %s108
      %s123 = sphi 0, %s109
      %s127 = sphi 0, %s127
      %s129 = sphi 0, %s127
      %s130 = sphi 0, %s129
      %s144 = sphi 0, %s130
      %s148 = sphi 0, %s148
      %s150 = sphi 0, %s148
      %s151 = sphi 0, %s150
      %s165 = sphi 0, %s151
      %s169 = sphi 0, %s169
      %s171 = sphi 0, %s169
      %s172 = sphi 0, %s171
      %s186 = sphi 0, %s172
      %s190 = sphi 0, %s190
      %s192 = sphi 0, %s190
      %s193 = sphi 0, %s192
      %s207 = sphi 0, %s193
      %s211 = sphi 0, %s211
      %s213 = sphi 0, %s211
      %s214 = sphi 0, %s213
      %s228 = sphi 0, %s214
      %s232 = sphi 0, %s232
      %s234 = sphi 0, %s232
      %s235 = sphi 0, %s234
      %s249 = sphi 0, %s235
      %s253 = sphi 0, %s253
      %s255 = sphi 0, %s253
      %s256 = sphi 0, %s255
      %s270 = sphi 0, %s256
      %s274 = sphi 0, %s274
      %s276 = sphi 0, %s274
      %s277 = sphi 0, %s276
      %s291 = sphi 0, %s277
      %s295 = sphi 0, %s295
      %s297 = sphi 0, %s295
      %s298 = sphi 0, %s297
      %s312 = sphi 0, %s298
      %s316 = sphi 0, %s316
      %s318 = sphi 0, %s316
      %s319 = sphi 0, %s318
      %s333 = sphi 0, %s319
      %s337 = sphi 0, %s337
      %s339 = sphi 0, %s337
      %s340 = sphi 0, %s339
      %s354 = sphi 0, %s340
      %s358 = sphi 0, %s358
      %s360 = sphi 0, %s358
      %s361 = sphi 0, %s360
      %s375 = sphi 0, %s361
      %s381 = sphi 0, %s383
      %s384 = sphi 0, %s381
      %s385 = sphi 0, %s384
      %s401 = sphi 0, %s385
    $region4: #{tpu_custom_call.1} parent=1 // loop_header_branch
      %28 = sbr.rel (%p26) target = $region8
    $region5: #{tpu_custom_call.1} parent=1 // loop_body
      %s30 = ssub.s32 %s25, 1
      %s31 = ssub.s32 %s25, 2
      %s32 = sadd.s32 %s25, 1
      %s33 = ssub.s32 %s25, %s32
      %p34 = scmp.eq.s32.totalorder %s33, 0
      %s36 = sadd.s32 %s35, 1
      %s37 = scalar_select %p34, %s35, %s36
      %p40 = pneg %p34
      %p41 = scmp.eq.s32.totalorder %s25, 1
      %p42 = por %p40, %p41
      %p43 = scmp.ne.s32.totalorder %s35, %s38
      %p44 = scmp.eq.s32.totalorder %s25, 0
      %p45 = por %p43, %p44
      %p46 = scmp.ne.s32.totalorder %s35, %s38
      %p47 = scmp.eq.s32.totalorder %s30, 1
      %p48 = por %p46, %p47
      %p49 = scmp.ne.s32.totalorder %s38, %s39
      %p50 = scmp.eq.s32.totalorder %s30, 0
      %p51 = por %p49, %p50
      %p52 = scmp.ne.s32.totalorder %s38, %s39
      %p53 = scmp.eq.s32.totalorder %s31, 1
      %p54 = por %p52, %p53
      %p56 = scmp.ne.s32.totalorder %s39, %s55
      %p57 = scmp.eq.s32.totalorder %s31, 0
      %p58 = por %p56, %p57
      %s59 = ssub.s32 %s25, %s32
      %p60 = scmp.eq.s32.totalorder %s59, 0
      %s62 = sadd.s32 %s61, 1
      %s63 = scalar_select %p60, %s61, %s62
      %p66 = pneg %p60
      %p67 = scmp.eq.s32.totalorder %s25, 1
      %p68 = por %p66, %p67
      %p69 = scmp.ne.s32.totalorder %s61, %s64
      %p70 = scmp.eq.s32.totalorder %s25, 0
      %p71 = por %p69, %p70
      %p72 = scmp.ne.s32.totalorder %s61, %s64
      %p73 = scmp.eq.s32.totalorder %s30, 1
      %p74 = por %p72, %p73
      %p75 = scmp.ne.s32.totalorder %s64, %s65
      %p76 = scmp.eq.s32.totalorder %s30, 0
      %p77 = por %p75, %p76
      %p78 = scmp.ne.s32.totalorder %s64, %s65
      %p79 = scmp.eq.s32.totalorder %s31, 1
      %p80 = por %p78, %p79
      %p82 = scmp.ne.s32.totalorder %s65, %s81
      %p83 = scmp.eq.s32.totalorder %s31, 0
      %p84 = por %p82, %p83
      %s86 = sadd.s32 %s85, 1
      %p89 = scmp.eq.s32.totalorder %s25, 1
      %p90 = scmp.ne.s32.totalorder %s85, %s87
      %p91 = scmp.eq.s32.totalorder %s25, 0
      %p92 = por %p90, %p91
      %p93 = scmp.ne.s32.totalorder %s85, %s87
      %p94 = scmp.eq.s32.totalorder %s30, 1
      %p95 = por %p93, %p94
      %p96 = scmp.ne.s32.totalorder %s87, %s88
      %p97 = scmp.eq.s32.totalorder %s30, 0
      %p98 = por %p96, %p97
      %p99 = scmp.ne.s32.totalorder %s87, %s88
      %p100 = scmp.eq.s32.totalorder %s31, 1
      %p101 = por %p99, %p100
      %p103 = scmp.ne.s32.totalorder %s88, %s102
      %p104 = scmp.eq.s32.totalorder %s31, 0
      %p105 = por %p103, %p104
      %s107 = sadd.s32 %s106, 1
      %p110 = scmp.eq.s32.totalorder %s25, 1
      %p111 = scmp.ne.s32.totalorder %s106, %s108
      %p112 = scmp.eq.s32.totalorder %s25, 0
      %p113 = por %p111, %p112
      %p114 = scmp.ne.s32.totalorder %s106, %s108
      %p115 = scmp.eq.s32.totalorder %s30, 1
      %p116 = por %p114, %p115
      %p117 = scmp.ne.s32.totalorder %s108, %s109
      %p118 = scmp.eq.s32.totalorder %s30, 0
      %p119 = por %p117, %p118
      %p120 = scmp.ne.s32.totalorder %s108, %s109
      %p121 = scmp.eq.s32.totalorder %s31, 1
      %p122 = por %p120, %p121
      %p124 = scmp.ne.s32.totalorder %s109, %s123
      %p125 = scmp.eq.s32.totalorder %s31, 0
      %p126 = por %p124, %p125
      %s128 = sadd.s32 %s127, 1
      %p131 = scmp.eq.s32.totalorder %s25, 1
      %p132 = scmp.ne.s32.totalorder %s127, %s129
      %p133 = scmp.eq.s32.totalorder %s25, 0
      %p134 = por %p132, %p133
      %p135 = scmp.ne.s32.totalorder %s127, %s129
      %p136 = scmp.eq.s32.totalorder %s30, 1
      %p137 = por %p135, %p136
      %p138 = scmp.ne.s32.totalorder %s129, %s130
      %p139 = scmp.eq.s32.totalorder %s30, 0
      %p140 = por %p138, %p139
      %p141 = scmp.ne.s32.totalorder %s129, %s130
      %p142 = scmp.eq.s32.totalorder %s31, 1
      %p143 = por %p141, %p142
      %p145 = scmp.ne.s32.totalorder %s130, %s144
      %p146 = scmp.eq.s32.totalorder %s31, 0
      %p147 = por %p145, %p146
      %s149 = sadd.s32 %s148, 1
      %p152 = scmp.eq.s32.totalorder %s25, 1
      %p153 = scmp.ne.s32.totalorder %s148, %s150
      %p154 = scmp.eq.s32.totalorder %s25, 0
      %p155 = por %p153, %p154
      %p156 = scmp.ne.s32.totalorder %s148, %s150
      %p157 = scmp.eq.s32.totalorder %s30, 1
      %p158 = por %p156, %p157
      %p159 = scmp.ne.s32.totalorder %s150, %s151
      %p160 = scmp.eq.s32.totalorder %s30, 0
      %p161 = por %p159, %p160
      %p162 = scmp.ne.s32.totalorder %s150, %s151
      %p163 = scmp.eq.s32.totalorder %s31, 1
      %p164 = por %p162, %p163
      %p166 = scmp.ne.s32.totalorder %s151, %s165
      %p167 = scmp.eq.s32.totalorder %s31, 0
      %p168 = por %p166, %p167
      %s170 = sadd.s32 %s169, 1
      %p173 = scmp.eq.s32.totalorder %s25, 1
      %p174 = scmp.ne.s32.totalorder %s169, %s171
      %p175 = scmp.eq.s32.totalorder %s25, 0
      %p176 = por %p174, %p175
      %p177 = scmp.ne.s32.totalorder %s169, %s171
      %p178 = scmp.eq.s32.totalorder %s30, 1
      %p179 = por %p177, %p178
      %p180 = scmp.ne.s32.totalorder %s171, %s172
      %p181 = scmp.eq.s32.totalorder %s30, 0
      %p182 = por %p180, %p181
      %p183 = scmp.ne.s32.totalorder %s171, %s172
      %p184 = scmp.eq.s32.totalorder %s31, 1
      %p185 = por %p183, %p184
      %p187 = scmp.ne.s32.totalorder %s172, %s186
      %p188 = scmp.eq.s32.totalorder %s31, 0
      %p189 = por %p187, %p188
      %s191 = sadd.s32 %s190, 1
      %p194 = scmp.eq.s32.totalorder %s25, 1
      %p195 = scmp.ne.s32.totalorder %s190, %s192
      %p196 = scmp.eq.s32.totalorder %s25, 0
      %p197 = por %p195, %p196
      %p198 = scmp.ne.s32.totalorder %s190, %s192
      %p199 = scmp.eq.s32.totalorder %s30, 1
      %p200 = por %p198, %p199
      %p201 = scmp.ne.s32.totalorder %s192, %s193
      %p202 = scmp.eq.s32.totalorder %s30, 0
      %p203 = por %p201, %p202
      %p204 = scmp.ne.s32.totalorder %s192, %s193
      %p205 = scmp.eq.s32.totalorder %s31, 1
      %p206 = por %p204, %p205
      %p208 = scmp.ne.s32.totalorder %s193, %s207
      %p209 = scmp.eq.s32.totalorder %s31, 0
      %p210 = por %p208, %p209
      %s212 = sadd.s32 %s211, 1
      %p215 = scmp.eq.s32.totalorder %s25, 1
      %p216 = scmp.ne.s32.totalorder %s211, %s213
      %p217 = scmp.eq.s32.totalorder %s25, 0
      %p218 = por %p216, %p217
      %p219 = scmp.ne.s32.totalorder %s211, %s213
      %p220 = scmp.eq.s32.totalorder %s30, 1
      %p221 = por %p219, %p220
      %p222 = scmp.ne.s32.totalorder %s213, %s214
      %p223 = scmp.eq.s32.totalorder %s30, 0
      %p224 = por %p222, %p223
      %p225 = scmp.ne.s32.totalorder %s213, %s214
      %p226 = scmp.eq.s32.totalorder %s31, 1
      %p227 = por %p225, %p226
      %p229 = scmp.ne.s32.totalorder %s214, %s228
      %p230 = scmp.eq.s32.totalorder %s31, 0
      %p231 = por %p229, %p230
      %s233 = sadd.s32 %s232, 1
      %p236 = scmp.eq.s32.totalorder %s25, 1
      %p237 = scmp.ne.s32.totalorder %s232, %s234
      %p238 = scmp.eq.s32.totalorder %s25, 0
      %p239 = por %p237, %p238
      %p240 = scmp.ne.s32.totalorder %s232, %s234
      %p241 = scmp.eq.s32.totalorder %s30, 1
      %p242 = por %p240, %p241
      %p243 = scmp.ne.s32.totalorder %s234, %s235
      %p244 = scmp.eq.s32.totalorder %s30, 0
      %p245 = por %p243, %p244
      %p246 = scmp.ne.s32.totalorder %s234, %s235
      %p247 = scmp.eq.s32.totalorder %s31, 1
      %p248 = por %p246, %p247
      %p250 = scmp.ne.s32.totalorder %s235, %s249
      %p251 = scmp.eq.s32.totalorder %s31, 0
      %p252 = por %p250, %p251
      %s254 = sadd.s32 %s253, 1
      %p257 = scmp.eq.s32.totalorder %s25, 1
      %p258 = scmp.ne.s32.totalorder %s253, %s255
      %p259 = scmp.eq.s32.totalorder %s25, 0
      %p260 = por %p258, %p259
      %p261 = scmp.ne.s32.totalorder %s253, %s255
      %p262 = scmp.eq.s32.totalorder %s30, 1
      %p263 = por %p261, %p262
      %p264 = scmp.ne.s32.totalorder %s255, %s256
      %p265 = scmp.eq.s32.totalorder %s30, 0
      %p266 = por %p264, %p265
      %p267 = scmp.ne.s32.totalorder %s255, %s256
      %p268 = scmp.eq.s32.totalorder %s31, 1
      %p269 = por %p267, %p268
      %p271 = scmp.ne.s32.totalorder %s256, %s270
      %p272 = scmp.eq.s32.totalorder %s31, 0
      %p273 = por %p271, %p272
      %s275 = sadd.s32 %s274, 1
      %p278 = scmp.eq.s32.totalorder %s25, 1
      %p279 = scmp.ne.s32.totalorder %s274, %s276
      %p280 = scmp.eq.s32.totalorder %s25, 0
      %p281 = por %p279, %p280
      %p282 = scmp.ne.s32.totalorder %s274, %s276
      %p283 = scmp.eq.s32.totalorder %s30, 1
      %p284 = por %p282, %p283
      %p285 = scmp.ne.s32.totalorder %s276, %s277
      %p286 = scmp.eq.s32.totalorder %s30, 0
      %p287 = por %p285, %p286
      %p288 = scmp.ne.s32.totalorder %s276, %s277
      %p289 = scmp.eq.s32.totalorder %s31, 1
      %p290 = por %p288, %p289
      %p292 = scmp.ne.s32.totalorder %s277, %s291
      %p293 = scmp.eq.s32.totalorder %s31, 0
      %p294 = por %p292, %p293
      %s296 = sadd.s32 %s295, 1
      %p299 = scmp.eq.s32.totalorder %s25, 1
      %p300 = scmp.ne.s32.totalorder %s295, %s297
      %p301 = scmp.eq.s32.totalorder %s25, 0
      %p302 = por %p300, %p301
      %p303 = scmp.ne.s32.totalorder %s295, %s297
      %p304 = scmp.eq.s32.totalorder %s30, 1
      %p305 = por %p303, %p304
      %p306 = scmp.ne.s32.totalorder %s297, %s298
      %p307 = scmp.eq.s32.totalorder %s30, 0
      %p308 = por %p306, %p307
      %p309 = scmp.ne.s32.totalorder %s297, %s298
      %p310 = scmp.eq.s32.totalorder %s31, 1
      %p311 = por %p309, %p310
      %p313 = scmp.ne.s32.totalorder %s298, %s312
      %p314 = scmp.eq.s32.totalorder %s31, 0
      %p315 = por %p313, %p314
      %s317 = sadd.s32 %s316, 1
      %p320 = scmp.eq.s32.totalorder %s25, 1
      %p321 = scmp.ne.s32.totalorder %s316, %s318
      %p322 = scmp.eq.s32.totalorder %s25, 0
      %p323 = por %p321, %p322
      %p324 = scmp.ne.s32.totalorder %s316, %s318
      %p325 = scmp.eq.s32.totalorder %s30, 1
      %p326 = por %p324, %p325
      %p327 = scmp.ne.s32.totalorder %s318, %s319
      %p328 = scmp.eq.s32.totalorder %s30, 0
      %p329 = por %p327, %p328
      %p330 = scmp.ne.s32.totalorder %s318, %s319
      %p331 = scmp.eq.s32.totalorder %s31, 1
      %p332 = por %p330, %p331
      %p334 = scmp.ne.s32.totalorder %s319, %s333
      %p335 = scmp.eq.s32.totalorder %s31, 0
      %p336 = por %p334, %p335
      %s338 = sadd.s32 %s337, 1
      %p341 = scmp.eq.s32.totalorder %s25, 1
      %p342 = scmp.ne.s32.totalorder %s337, %s339
      %p343 = scmp.eq.s32.totalorder %s25, 0
      %p344 = por %p342, %p343
      %p345 = scmp.ne.s32.totalorder %s337, %s339
      %p346 = scmp.eq.s32.totalorder %s30, 1
      %p347 = por %p345, %p346
      %p348 = scmp.ne.s32.totalorder %s339, %s340
      %p349 = scmp.eq.s32.totalorder %s30, 0
      %p350 = por %p348, %p349
      %p351 = scmp.ne.s32.totalorder %s339, %s340
      %p352 = scmp.eq.s32.totalorder %s31, 1
      %p353 = por %p351, %p352
      %p355 = scmp.ne.s32.totalorder %s340, %s354
      %p356 = scmp.eq.s32.totalorder %s31, 0
      %p357 = por %p355, %p356
      %s359 = sadd.s32 %s358, 1
      %p362 = scmp.eq.s32.totalorder %s25, 1
      %p363 = scmp.ne.s32.totalorder %s358, %s360
      %p364 = scmp.eq.s32.totalorder %s25, 0
      %p365 = por %p363, %p364
      %p366 = scmp.ne.s32.totalorder %s358, %s360
      %p367 = scmp.eq.s32.totalorder %s30, 1
      %p368 = por %p366, %p367
      %p369 = scmp.ne.s32.totalorder %s360, %s361
      %p370 = scmp.eq.s32.totalorder %s30, 0
      %p371 = por %p369, %p370
      %p372 = scmp.ne.s32.totalorder %s360, %s361
      %p373 = scmp.eq.s32.totalorder %s31, 1
      %p374 = por %p372, %p373
      %p376 = scmp.ne.s32.totalorder %s361, %s375
      %p377 = scmp.eq.s32.totalorder %s31, 0
      %p378 = por %p376, %p377
      %s379 = ssub.s32 %s25, %s32
      %p380 = scmp.eq.s32.totalorder %s379, 0
      %s382 = sadd.s32 %s381, 1
      %s383 = scalar_select %p380, %s381, %s382
      %p386 = pneg %p380
      %p387 = scmp.eq.s32.totalorder %s25, 1
      %p388 = por %p386, %p387
      %p389 = scmp.ne.s32.totalorder %s381, %s384
      %p390 = scmp.eq.s32.totalorder %s25, 0
      %p391 = por %p389, %p390
      %p392 = scmp.ne.s32.totalorder %s381, %s384
      %p393 = scmp.eq.s32.totalorder %s30, 1
      %p394 = por %p392, %p393
      %p395 = scmp.ne.s32.totalorder %s384, %s385
      %p396 = scmp.eq.s32.totalorder %s30, 0
      %p397 = por %p395, %p396
      %p398 = scmp.ne.s32.totalorder %s384, %s385
      %p399 = scmp.eq.s32.totalorder %s31, 1
      %p400 = por %p398, %p399
      %p402 = scmp.ne.s32.totalorder %s385, %s401
      %p403 = scmp.eq.s32.totalorder %s31, 0
      %p404 = por %p402, %p403
      %p405 = scmp.le.s32.totalorder 1, %s25
      %p406 = scmp.lt.s32.totalorder %s25, 3
      %p407 = pnand %p405, %p406
      %p408 = pneg %p407
      // Predicated region
      $region9: #{tpu_custom_call.1} parent=5 // pred_check
        _
      $region10: #{tpu_custom_call.1} parent=5 // pred_check_branch
        %410 = sbr.rel (%p407) target = $region12
      $region11: #{tpu_custom_call.1} parent=5 // pred_region
        %s411 = ssub.s32 %s25, 1
        // Predicated region
        $region13: #{tpu_custom_call.1} parent=11 // pred_check
          %p412 = pneg %p98
        $region14: #{tpu_custom_call.1} parent=11 // pred_check_branch
          %414 = sbr.rel (%p412) target = $region16
        $region15: #{tpu_custom_call.1} parent=11 // pred_region
          _
        $region16: #{tpu_custom_call.1} parent=11 // pred_fallthru
          _
        // Predicated region
        $region17: #{tpu_custom_call.1} parent=11 // pred_check
          %p415 = pneg %p119
        $region18: #{tpu_custom_call.1} parent=11 // pred_check_branch
          %417 = sbr.rel (%p415) target = $region20
        $region19: #{tpu_custom_call.1} parent=11 // pred_region
          _
        $region20: #{tpu_custom_call.1} parent=11 // pred_fallthru
          _
        // Predicated region
        $region21: #{tpu_custom_call.1} parent=11 // pred_check
          %p418 = pneg %p140
        $region22: #{tpu_custom_call.1} parent=11 // pred_check_branch
          %420 = sbr.rel (%p418) target = $region24
        $region23: #{tpu_custom_call.1} parent=11 // pred_region
          _
        $region24: #{tpu_custom_call.1} parent=11 // pred_fallthru
          _
        // Predicated region
        $region25: #{tpu_custom_call.1} parent=11 // pred_check
          %p421 = pneg %p161
        $region26: #{tpu_custom_call.1} parent=11 // pred_check_branch
          %423 = sbr.rel (%p421) target = $region28
        $region27: #{tpu_custom_call.1} parent=11 // pred_region
          _
        $region28: #{tpu_custom_call.1} parent=11 // pred_fallthru
          _
        // Predicated region
        $region29: #{tpu_custom_call.1} parent=11 // pred_check
          %p424 = pneg %p182
        $region30: #{tpu_custom_call.1} parent=11 // pred_check_branch
          %426 = sbr.rel (%p424) target = $region32
        $region31: #{tpu_custom_call.1} parent=11 // pred_region
          _
        $region32: #{tpu_custom_call.1} parent=11 // pred_fallthru
          _
        // Predicated region
        $region33: #{tpu_custom_call.1} parent=11 // pred_check
          %p427 = pneg %p203
        $region34: #{tpu_custom_call.1} parent=11 // pred_check_branch
          %429 = sbr.rel (%p427) target = $region36
        $region35: #{tpu_custom_call.1} parent=11 // pred_region
          _
        $region36: #{tpu_custom_call.1} parent=11 // pred_fallthru
          _
        // Predicated region
        $region37: #{tpu_custom_call.1} parent=11 // pred_check
          %p430 = pneg %p224
        $region38: #{tpu_custom_call.1} parent=11 // pred_check_branch
          %432 = sbr.rel (%p430) target = $region40
        $region39: #{tpu_custom_call.1} parent=11 // pred_region
          _
        $region40: #{tpu_custom_call.1} parent=11 // pred_fallthru
          _
        // Predicated region
        $region41: #{tpu_custom_call.1} parent=11 // pred_check
          %p433 = pneg %p245
        $region42: #{tpu_custom_call.1} parent=11 // pred_check_branch
          %435 = sbr.rel (%p433) target = $region44
        $region43: #{tpu_custom_call.1} parent=11 // pred_region
          _
        $region44: #{tpu_custom_call.1} parent=11 // pred_fallthru
          _
        // Predicated region
        $region45: #{tpu_custom_call.1} parent=11 // pred_check
          %p436 = pneg %p266
        $region46: #{tpu_custom_call.1} parent=11 // pred_check_branch
          %438 = sbr.rel (%p436) target = $region48
        $region47: #{tpu_custom_call.1} parent=11 // pred_region
          _
        $region48: #{tpu_custom_call.1} parent=11 // pred_fallthru
          _
        // Predicated region
        $region49: #{tpu_custom_call.1} parent=11 // pred_check
          %p439 = pneg %p287
        $region50: #{tpu_custom_call.1} parent=11 // pred_check_branch
          %441 = sbr.rel (%p439) target = $region52
        $region51: #{tpu_custom_call.1} parent=11 // pred_region
          _
        $region52: #{tpu_custom_call.1} parent=11 // pred_fallthru
          _
        // Predicated region
        $region53: #{tpu_custom_call.1} parent=11 // pred_check
          %p442 = pneg %p308
        $region54: #{tpu_custom_call.1} parent=11 // pred_check_branch
          %444 = sbr.rel (%p442) target = $region56
        $region55: #{tpu_custom_call.1} parent=11 // pred_region
          _
        $region56: #{tpu_custom_call.1} parent=11 // pred_fallthru
          _
        // Predicated region
        $region57: #{tpu_custom_call.1} parent=11 // pred_check
          %p445 = pneg %p329
        $region58: #{tpu_custom_call.1} parent=11 // pred_check_branch
          %447 = sbr.rel (%p445) target = $region60
        $region59: #{tpu_custom_call.1} parent=11 // pred_region
          _
        $region60: #{tpu_custom_call.1} parent=11 // pred_fallthru
          _
        // Predicated region
        $region61: #{tpu_custom_call.1} parent=11 // pred_check
          %p448 = pneg %p350
        $region62: #{tpu_custom_call.1} parent=11 // pred_check_branch
          %450 = sbr.rel (%p448) target = $region64
        $region63: #{tpu_custom_call.1} parent=11 // pred_region
          _
        $region64: #{tpu_custom_call.1} parent=11 // pred_fallthru
          _
        // Predicated region
        $region65: #{tpu_custom_call.1} parent=11 // pred_check
          %p451 = pneg %p371
        $region66: #{tpu_custom_call.1} parent=11 // pred_check_branch
          %453 = sbr.rel (%p451) target = $region68
        $region67: #{tpu_custom_call.1} parent=11 // pred_region
          _
        $region68: #{tpu_custom_call.1} parent=11 // pred_fallthru
          _
      $region12: #{tpu_custom_call.1} parent=5 // pred_fallthru
        _
      %p454 = scmp.lt.s32.totalorder %s25, 2
      // Predicated region
      $region69: #{tpu_custom_call.1} parent=5 // pred_check
        %p455 = pneg %p454
      $region70: #{tpu_custom_call.1} parent=5 // pred_check_branch
        %457 = sbr.rel (%p455) target = $region72
      $region71: #{tpu_custom_call.1} parent=5 // pred_region
        // Predicated region
        $region73: #{tpu_custom_call.1} parent=71 // pred_check
          %p458 = pneg %p45
        $region74: #{tpu_custom_call.1} parent=71 // pred_check_branch
          %460 = sbr.rel (%p458) target = $region76
        $region75: #{tpu_custom_call.1} parent=71 // pred_region
          %p461 = scmp.lt.s32.totalorder %s25, 1
          %s462 = scalar_select %p461, %s25, 1
          %s463 = smul.addr %s462, 8
          %s464 = scalar_lea.vmem %s0, %s463
        $region76: #{tpu_custom_call.1} parent=71 // pred_fallthru
          _
        // Predicated region
        $region77: #{tpu_custom_call.1} parent=71 // pred_check
          %p465 = pneg %p71
        $region78: #{tpu_custom_call.1} parent=71 // pred_check_branch
          %467 = sbr.rel (%p465) target = $region80
        $region79: #{tpu_custom_call.1} parent=71 // pred_region
          %p468 = scmp.lt.s32.totalorder %s25, 1
          %s469 = scalar_select %p468, %s25, 1
          %s470 = smul.addr %s469, 2
          %s471 = smul.addr %s470, 8
          %s472 = scalar_lea.vmem %s1, %s471
        $region80: #{tpu_custom_call.1} parent=71 // pred_fallthru
          _
      $region72: #{tpu_custom_call.1} parent=5 // pred_fallthru
        _
      %p473 = scmp.le.s32.totalorder 1, %s25
      %p474 = scmp.lt.s32.totalorder %s25, 3
      %p475 = pnand %p473, %p474
      %p476 = pneg %p475
      // Predicated region
      $region81: #{tpu_custom_call.1} parent=5 // pred_check
        _
      $region82: #{tpu_custom_call.1} parent=5 // pred_check_branch
        %478 = sbr.rel (%p475) target = $region84
      $region83: #{tpu_custom_call.1} parent=5 // pred_region
        %s479 = ssub.s32 %s25, 1
        %p480 = scmp.lt.s32.totalorder %s30, 1
        %s481 = scalar_select %p480, %s30, 1
        %s482 = smul.addr %s481, 8
        %s483 = scalar_lea.vmem %s0, %s482
        %p484 = pneg %p51
        %p485 = pneg %p48
        %p486 = scmp.lt.s32.totalorder %s30, 1
        %s487 = scalar_select %p486, %s30, 1
        %s488 = smul.addr %s487, 2
        %s489 = smul.addr %s488, 8
        %s490 = scalar_lea.vmem %s1, %s489
        %p491 = pneg %p77
        %p492 = pneg %p74
        %p493 = pneg %p98
        %p494 = pneg %p95
        %p495 = pneg %p119
        %p496 = pneg %p116
        %p497 = pneg %p140
        %p498 = pneg %p137
        %p499 = pneg %p161
        %p500 = pneg %p158
        %p501 = pneg %p182
        %p502 = pneg %p179
        %p503 = pneg %p203
        %p504 = pneg %p200
        %p505 = pneg %p224
        %p506 = pneg %p221
        %p507 = pneg %p245
        %p508 = pneg %p242
        %p509 = pneg %p266
        %p510 = pneg %p263
        %p511 = pneg %p287
        %p512 = pneg %p284
        %p513 = pneg %p308
        %p514 = pneg %p305
        %p515 = pneg %p329
        %p516 = pneg %p326
        %p517 = pneg %p350
        %p518 = pneg %p347
        %p519 = pneg %p371
        %p520 = pneg %p368
        %p521 = pneg %p397
        %p522 = pneg %p394
        %s523 = sand.u32 %s384, 1
        %s524 = scalar_lea.sflag [#allocation3], %s523
        %s525 = sand.u32 %s384, 1
        %s526 = smul.addr %s525, 16
        %s527 = scalar_lea.vmem [#allocation2], %s526
        %p528 = scmp.lt.s32.totalorder %s30, 1
        %s529 = scalar_select %p528, %s30, 1
        %s530 = smul.addr %s529, 8
        %s531 = scalar_lea.vmem %s0, %s530
        %p532 = scmp.lt.s32.totalorder %s30, 1
        %s533 = scalar_select %p532, %s30, 1
        %s534 = smul.addr %s533, 2
        %s535 = smul.addr %s534, 8
        %s536 = scalar_lea.vmem %s1, %s535
        %v537 = vlaneseq
        %v538 = vand.u32 %v537, 127
        %vm539 = vcmp.gt.s32.totalorder %v538, 0
        %v540 = vsel %vm539, 1, 0
        %v541 = vcvt.s32.f32 %v540
        %vm542 = vcmp.lt.s32.totalorder %v538, 127
        %v543 = vsel %vm542, 1, 0
        %v544 = vcvt.s32.f32 %v543
        %v545 = vld [vmem:[%s2] sm:$0xff]
        %v546 = vld [vmem:[%s3] sm:$0xff]
        %v547 = vld [vmem:[%s4] sm:$0xff]
        %v548 = vld [vmem:[%s5] sm:$0xff]
        %v549 = vld [vmem:[%s6] sm:$0xff]
        %v550 = vld [vmem:[%s6 + $0x8] sm:$0xff]
        %v551 = vld [vmem:[%s7] sm:$0xff]
        %v552 = vld [vmem:[%s7 + $0x8] sm:$0xff]
        %v553 = vld [vmem:[%s8] sm:$0xff]
        %v554 = vld [vmem:[%s9] sm:$0xff]
        %v555 = vld [vmem:[%s9 + $0x8] sm:$0xff]
        %v556 = vld [vmem:[%s10] sm:$0xff]
        %v557 = vld [vmem:[%s10 + $0x8] sm:$0xff]
        %v558 = vld [vmem:[%s11] sm:$0xff]
        %v559 = vld [vmem:[%s11 + $0x8] sm:$0xff]
        %v560 = vld [vmem:[%s12] sm:$0xff]
        %v561 = vld [vmem:[%s12 + $0x8] sm:$0xff]
        %v562 = vld [vmem:[%s13] sm:$0xff]
        %v563 = vld [vmem:[%s13 + $0x8] sm:$0xff]
        %v564 = vld [vmem:[%s14] sm:$0xff]
        %v565 = vld [vmem:[%s14 + $0x8] sm:$0xff]
        %v566 = vld [vmem:[%s15] sm:$0xff]
        %v567 = vld [vmem:[%s15 + $0x8] sm:$0xff]
        %v568 = vld [vmem:[%s531] sm:$0xff]
        %vm569 = vcmask 64512
        %v571 = vsel %vm569, %v545, 0
        %573 = vmatpush.msra.mxu0 0.0
        %574 = vmatpush.msra.mxu0 0.0
        %575 = vmatpush.msra.mxu0 0.0
        %576 = vmatpush.msra.mxu0 0.0
        %577 = vmatpush.msra.mxu0 0.0
        %578 = vmatpush.msra.mxu0 0.0
        %579 = vmatpush.msra.mxu0 0.0
        %580 = vmatpush.msra.mxu0 0.0
        %581 = vmatpush.msra.mxu0 0.0
        %582 = vmatpush.msra.mxu0 0.0
        %583 = vmatpush.msra.mxu0 0.0
        %584 = vmatpush.msra.mxu0 0.0
        %585 = vmatpush.msra.mxu0 0.0
        %586 = vmatpush.msra.mxu0 0.0
        %587 = vmatpush.msra.mxu0 0.0
        %588 = vmatpush.msra.mxu0 %v568
        %589 = vmatmul.f32.gmra.mxu0 %v571
        %v590 = vpop.f32.mrf.mxu0
        %v591 = vadd.f32 0.0, %v590
        %592 = vdwg.mxu0
        %593 = vadd.xlane.f32.xlu0 %v591
        %v594 = vpop.xlane.xlu0 %593
        %v595 = vmul.f32 %v594, 0.0078125
        %v597 = vsel %vm569, %v546, 0
        %599 = vmatpush.msra.mxu0 0.0
        %600 = vmatpush.msra.mxu0 0.0
        %601 = vmatpush.msra.mxu0 0.0
        %602 = vmatpush.msra.mxu0 0.0
        %603 = vmatpush.msra.mxu0 0.0
        %604 = vmatpush.msra.mxu0 0.0
        %605 = vmatpush.msra.mxu0 0.0
        %606 = vmatpush.msra.mxu0 0.0
        %607 = vmatpush.msra.mxu0 0.0
        %608 = vmatpush.msra.mxu0 0.0
        %609 = vmatpush.msra.mxu0 0.0
        %610 = vmatpush.msra.mxu0 0.0
        %611 = vmatpush.msra.mxu0 0.0
        %612 = vmatpush.msra.mxu0 0.0
        %613 = vmatpush.msra.mxu0 0.0
        %614 = vmatpush.msra.mxu0 %v595
        %615 = vmatmul.f32.gmra.mxu0 %v597
        %v616 = vpop.f32.mrf.mxu0
        %v617 = vadd.f32 0.0, %v616
        %618 = vdwg.mxu0
        %620 = vset.pattern.permute.xlu0 0
        %621 = vperm.xlu0 %620, %v617
        %v622 = vpop.permute.xlu0 %621
        %v624 = vsub.f32 %v568, %v622
        %v625 = vmul.f32 %v624, %v624
        %626 = vmatpush.msra.mxu0 0.0
        %627 = vmatpush.msra.mxu0 0.0
        %628 = vmatpush.msra.mxu0 0.0
        %629 = vmatpush.msra.mxu0 0.0
        %630 = vmatpush.msra.mxu0 0.0
        %631 = vmatpush.msra.mxu0 0.0
        %632 = vmatpush.msra.mxu0 0.0
        %633 = vmatpush.msra.mxu0 0.0
        %634 = vmatpush.msra.mxu0 0.0
        %635 = vmatpush.msra.mxu0 0.0
        %636 = vmatpush.msra.mxu0 0.0
        %637 = vmatpush.msra.mxu0 0.0
        %638 = vmatpush.msra.mxu0 0.0
        %639 = vmatpush.msra.mxu0 0.0
        %640 = vmatpush.msra.mxu0 0.0
        %641 = vmatpush.msra.mxu0 %v625
        %642 = vmatmul.f32.gmra.mxu0 %v571
        %v643 = vpop.f32.mrf.mxu0
        %v644 = vadd.f32 0.0, %v643
        %645 = vdwg.mxu0
        %646 = vadd.xlane.f32.xlu0 %v644
        %v647 = vpop.xlane.xlu0 %646
        %v648 = vmul.f32 %v647, 0.0078125
        %649 = vmatpush.msra.mxu0 0.0
        %650 = vmatpush.msra.mxu0 0.0
        %651 = vmatpush.msra.mxu0 0.0
        %652 = vmatpush.msra.mxu0 0.0
        %653 = vmatpush.msra.mxu0 0.0
        %654 = vmatpush.msra.mxu0 0.0
        %655 = vmatpush.msra.mxu0 0.0
        %656 = vmatpush.msra.mxu0 0.0
        %657 = vmatpush.msra.mxu0 0.0
        %658 = vmatpush.msra.mxu0 0.0
        %659 = vmatpush.msra.mxu0 0.0
        %660 = vmatpush.msra.mxu0 0.0
        %661 = vmatpush.msra.mxu0 0.0
        %662 = vmatpush.msra.mxu0 0.0
        %663 = vmatpush.msra.mxu0 0.0
        %664 = vmatpush.msra.mxu0 %v648
        %665 = vmatmul.f32.gmra.mxu0 %v597
        %v666 = vpop.f32.mrf.mxu0
        %v667 = vadd.f32 1e-05, %v666
        %668 = vdwg.mxu0
        %v669 = vrsqrt.pop %v667
        %v670 = vmul.f32 %v669, %v667
        %v671 = vmul.f32 %v670, %v669
        %v672 = vmul.f32 0.5, %v671
        %v673 = vsub.f32 1.5, %v672
        %v674 = vmul.f32 %v669, %v673
        %vm675 = vweird.f32 %v667
        %vm676 = vweird.f32 %v669
        %vm677 = vmor %vm675, %vm676
        %v678 = vsel %vm677, %v669, %v674
        %v679 = vmul.f32 %v678, %v547
        %681 = vset.pattern.permute.xlu0 0
        %682 = vperm.xlu0 %681, %v679
        %v683 = vpop.permute.xlu0 %682
        %v685 = vmul.f32 %v624, %v683
        %687 = vset.pattern.permute.xlu0 0
        %688 = vperm.xlu0 %687, %v548
        %v689 = vpop.permute.xlu0 %688
        %v691 = vadd.f32 %v685, %v689
        %v692 = vxor.u32 %v691, 2147483648
        %v693 = vmul.f32 %v692, 1.442695
        %v694 = vpow.pop %v693
        %v695 = vadd.f32 %v694, 1.0
        %v696 = vrcp.pop %v695
        %v697 = vmul.f32 %v695, %v696
        %v698 = vsub.f32 1.0, %v697
        %v699 = vmul.f32 %v696, %v698
        %v700 = vadd.f32 %v696, %v699
        %vm701 = vweird.f32 %v695
        %vm702 = vweird.f32 %v696
        %vm703 = vmor %vm701, %vm702
        %v704 = vsel %vm703, %v696, %v700
        %v705 = vand.u32 2147483647, %v695
        %vm706 = vcmp.eq.f32.partialorder %v705, 8.507059e+37
        %v707 = vand.u32 %v695, 2147483648
        %v708 = vor.u32 1.1754944e-38, %v707
        %v709 = vsel %vm706, %v708, %v704
        %v710 = vmul.f32 1.0, %v709
        %v711 = vmul.f32 %v691, %v710
        %712 = vrot.lane.b32.xlu0 %v711, 1
        %v713 = vpop.permute.xlu0 %712
        %v714 = vmul.f32 %v713, %v541
        %715 = vrot.lane.b32.xlu0 %v711, 127
        %v716 = vpop.permute.xlu0 %715
        %v717 = vmul.f32 %v716, %v544
        %719 = vset.pattern.permute.xlu0 0
        %720 = vperm.xlu0 %719, %v551
        %v721 = vpop.permute.xlu0 %720
        %724 = vset.pattern.permute.xlu0 0
        %725 = vperm.xlu0 %724, %v552
        %v726 = vpop.permute.xlu0 %725
        %vm728 = vcmask 195584
        %v730 = vsel %vm728, %v549, 0
        %v733 = vsel %vm728, %v550, 0
        %735 = vmatpush.msra.mxu0 0.0
        %736 = vmatpush.msra.mxu0 0.0
        %737 = vmatpush.msra.mxu0 0.0
        %738 = vmatpush.msra.mxu0 0.0
        %739 = vmatpush.msra.mxu0 0.0
        %740 = vmatpush.msra.mxu0 0.0
        %741 = vmatpush.msra.mxu0 0.0
        %742 = vmatpush.msra.mxu0 0.0
        %743 = vmatpush.msra.mxu0 0.0
        %744 = vmatpush.msra.mxu0 0.0
        %745 = vmatpush.msra.mxu0 0.0
        %746 = vmatpush.msra.mxu0 0.0
        %747 = vmatpush.msra.mxu0 0.0
        %748 = vmatpush.msra.mxu0 %v717
        %749 = vmatpush.msra.mxu0 %v711
        %750 = vmatpush.msra.mxu0 %v714
        %751 = vmatmul.f32.gmra.mxu0 %v730
        %v752 = vpop.f32.mrf.mxu0
        %v753 = vadd.f32 %v721, %v752
        %754 = vmatmul.f32.gmra.mxu0 %v733
        %v755 = vpop.f32.mrf.mxu0
        %v756 = vadd.f32 %v726, %v755
        %757 = vdwg.mxu0
        %v758 = vld [vmem:[%s536] sm:$0xff]
        %v759 = vld [vmem:[%s536 + $0x8] sm:$0xff]
        %761 = vset.pattern.permute.xlu0 0
        %762 = vperm.xlu0 %761, %v758
        %v763 = vpop.permute.xlu0 %762
        %766 = vset.pattern.permute.xlu0 0
        %767 = vperm.xlu0 %766, %v759
        %v768 = vpop.permute.xlu0 %767
        %v770 = vadd.f32 %v753, %v763
        %v771 = vadd.f32 %v756, %v768
        %vm772 = vcmask 130048
        %v774 = vsel %vm772, %v553, 0
        %776 = vmatpush.msra.mxu0 0.0
        %777 = vmatpush.msra.mxu0 0.0
        %778 = vmatpush.msra.mxu0 0.0
        %779 = vmatpush.msra.mxu0 0.0
        %780 = vmatpush.msra.mxu0 0.0
        %781 = vmatpush.msra.mxu0 0.0
        %782 = vmatpush.msra.mxu0 0.0
        %783 = vmatpush.msra.mxu0 0.0
        %784 = vmatpush.msra.mxu0 0.0
        %785 = vmatpush.msra.mxu0 0.0
        %786 = vmatpush.msra.mxu0 0.0
        %787 = vmatpush.msra.mxu0 0.0
        %788 = vmatpush.msra.mxu0 0.0
        %789 = vmatpush.msra.mxu0 0.0
        %790 = vmatpush.msra.mxu0 %v771
        %791 = vmatpush.msra.mxu0 %v770
        %792 = vmatmul.f32.gmra.mxu0 %v774
        %v793 = vpop.f32.mrf.mxu0
        %v794 = vadd.f32 0.0, %v793
        %795 = vdwg.mxu0
        %796 = vadd.xlane.f32.xlu0 %v794
        %v797 = vpop.xlane.xlu0 %796
        %v798 = vmul.f32 %v797, 0.00390625
        %v800 = vsel %vm569, %v554, 0
        %v803 = vsel %vm569, %v555, 0
        %805 = vmatpush.msra.mxu0 0.0
        %806 = vmatpush.msra.mxu0 0.0
        %807 = vmatpush.msra.mxu0 0.0
        %808 = vmatpush.msra.mxu0 0.0
        %809 = vmatpush.msra.mxu0 0.0
        %810 = vmatpush.msra.mxu0 0.0
        %811 = vmatpush.msra.mxu0 0.0
        %812 = vmatpush.msra.mxu0 0.0
        %813 = vmatpush.msra.mxu0 0.0
        %814 = vmatpush.msra.mxu0 0.0
        %815 = vmatpush.msra.mxu0 0.0
        %816 = vmatpush.msra.mxu0 0.0
        %817 = vmatpush.msra.mxu0 0.0
        %818 = vmatpush.msra.mxu0 0.0
        %819 = vmatpush.msra.mxu0 0.0
        %820 = vmatpush.msra.mxu0 %v798
        %821 = vmatmul.f32.gmra.mxu0 %v800
        %v822 = vpop.f32.mrf.mxu0
        %v823 = vadd.f32 0.0, %v822
        %824 = vmatmul.f32.gmra.mxu0 %v803
        %v825 = vpop.f32.mrf.mxu0
        %v826 = vadd.f32 0.0, %v825
        %827 = vdwg.mxu0
        %829 = vset.pattern.permute.xlu0 0
        %830 = vperm.xlu0 %829, %v823
        %v831 = vpop.permute.xlu0 %830
        %834 = vset.pattern.permute.xlu0 0
        %835 = vperm.xlu0 %834, %v826
        %v836 = vpop.permute.xlu0 %835
        %v838 = vsub.f32 %v770, %v831
        %v839 = vsub.f32 %v771, %v836
        %v840 = vmul.f32 %v838, %v838
        %v841 = vmul.f32 %v839, %v839
        %842 = vmatpush.msra.mxu0 0.0
        %843 = vmatpush.msra.mxu0 0.0
        %844 = vmatpush.msra.mxu0 0.0
        %845 = vmatpush.msra.mxu0 0.0
        %846 = vmatpush.msra.mxu0 0.0
        %847 = vmatpush.msra.mxu0 0.0
        %848 = vmatpush.msra.mxu0 0.0
        %849 = vmatpush.msra.mxu0 0.0
        %850 = vmatpush.msra.mxu0 0.0
        %851 = vmatpush.msra.mxu0 0.0
        %852 = vmatpush.msra.mxu0 0.0
        %853 = vmatpush.msra.mxu0 0.0
        %854 = vmatpush.msra.mxu0 0.0
        %855 = vmatpush.msra.mxu0 0.0
        %856 = vmatpush.msra.mxu0 %v841
        %857 = vmatpush.msra.mxu0 %v840
        %858 = vmatmul.f32.gmra.mxu0 %v774
        %v859 = vpop.f32.mrf.mxu0
        %v860 = vadd.f32 0.0, %v859
        %861 = vdwg.mxu0
        %862 = vadd.xlane.f32.xlu0 %v860
        %v863 = vpop.xlane.xlu0 %862
        %v864 = vmul.f32 %v863, 0.00390625
        %865 = vmatpush.msra.mxu0 0.0
        %866 = vmatpush.msra.mxu0 0.0
        %867 = vmatpush.msra.mxu0 0.0
        %868 = vmatpush.msra.mxu0 0.0
        %869 = vmatpush.msra.mxu0 0.0
        %870 = vmatpush.msra.mxu0 0.0
        %871 = vmatpush.msra.mxu0 0.0
        %872 = vmatpush.msra.mxu0 0.0
        %873 = vmatpush.msra.mxu0 0.0
        %874 = vmatpush.msra.mxu0 0.0
        %875 = vmatpush.msra.mxu0 0.0
        %876 = vmatpush.msra.mxu0 0.0
        %877 = vmatpush.msra.mxu0 0.0
        %878 = vmatpush.msra.mxu0 0.0
        %879 = vmatpush.msra.mxu0 0.0
        %880 = vmatpush.msra.mxu0 %v864
        %881 = vmatmul.f32.gmra.mxu0 %v800
        %v882 = vpop.f32.mrf.mxu0
        %v883 = vadd.f32 1e-05, %v882
        %884 = vmatmul.f32.gmra.mxu0 %v803
        %v885 = vpop.f32.mrf.mxu0
        %v886 = vadd.f32 1e-05, %v885
        %887 = vdwg.mxu0
        %v888 = vrsqrt.pop %v883
        %v889 = vmul.f32 %v888, %v883
        %v890 = vmul.f32 %v889, %v888
        %v891 = vmul.f32 0.5, %v890
        %v892 = vsub.f32 1.5, %v891
        %v893 = vmul.f32 %v888, %v892
        %vm894 = vweird.f32 %v883
        %vm895 = vweird.f32 %v888
        %vm896 = vmor %vm894, %vm895
        %v897 = vsel %vm896, %v888, %v893
        %v898 = vrsqrt.pop %v886
        %v899 = vmul.f32 %v898, %v886
        %v900 = vmul.f32 %v899, %v898
        %v901 = vmul.f32 0.5, %v900
        %v902 = vsub.f32 1.5, %v901
        %v903 = vmul.f32 %v898, %v902
        %vm904 = vweird.f32 %v886
        %vm905 = vweird.f32 %v898
        %vm906 = vmor %vm904, %vm905
        %v907 = vsel %vm906, %v898, %v903
        %v908 = vmul.f32 %v897, %v556
        %v909 = vmul.f32 %v907, %v557
        %911 = vset.pattern.permute.xlu0 0
        %912 = vperm.xlu0 %911, %v908
        %v913 = vpop.permute.xlu0 %912
        %916 = vset.pattern.permute.xlu0 0
        %917 = vperm.xlu0 %916, %v909
        %v918 = vpop.permute.xlu0 %917
        %v920 = vmul.f32 %v838, %v913
        %v921 = vmul.f32 %v839, %v918
        %923 = vset.pattern.permute.xlu0 0
        %924 = vperm.xlu0 %923, %v558
        %v925 = vpop.permute.xlu0 %924
        %928 = vset.pattern.permute.xlu0 0
        %929 = vperm.xlu0 %928, %v559
        %v930 = vpop.permute.xlu0 %929
        %v932 = vadd.f32 %v920, %v925
        %v933 = vadd.f32 %v921, %v930
        %v934 = vxor.u32 %v932, 2147483648
        %v935 = vxor.u32 %v933, 2147483648
        %v936 = vmul.f32 %v934, 1.442695
        %v937 = vpow.pop %v936
        %v938 = vmul.f32 %v935, 1.442695
        %v939 = vpow.pop %v938
        %v940 = vadd.f32 %v937, 1.0
        %v941 = vadd.f32 %v939, 1.0
        %v942 = vrcp.pop %v940
        %v943 = vmul.f32 %v940, %v942
        %v944 = vsub.f32 1.0, %v943
        %v945 = vmul.f32 %v942, %v944
        %v946 = vadd.f32 %v942, %v945
        %vm947 = vweird.f32 %v940
        %vm948 = vweird.f32 %v942
        %vm949 = vmor %vm947, %vm948
        %v950 = vsel %vm949, %v942, %v946
        %v951 = vand.u32 2147483647, %v940
        %vm952 = vcmp.eq.f32.partialorder %v951, 8.507059e+37
        %v953 = vand.u32 %v940, 2147483648
        %v954 = vor.u32 1.1754944e-38, %v953
        %v955 = vsel %vm952, %v954, %v950
        %v956 = vmul.f32 1.0, %v955
        %v957 = vrcp.pop %v941
        %v958 = vmul.f32 %v941, %v957
        %v959 = vsub.f32 1.0, %v958
        %v960 = vmul.f32 %v957, %v959
        %v961 = vadd.f32 %v957, %v960
        %vm962 = vweird.f32 %v941
        %vm963 = vweird.f32 %v957
        %vm964 = vmor %vm962, %vm963
        %v965 = vsel %vm964, %v957, %v961
        %v966 = vand.u32 2147483647, %v941
        %vm967 = vcmp.eq.f32.partialorder %v966, 8.507059e+37
        %v968 = vand.u32 %v941, 2147483648
        %v969 = vor.u32 1.1754944e-38, %v968
        %v970 = vsel %vm967, %v969, %v965
        %v971 = vmul.f32 1.0, %v970
        %v972 = vmul.f32 %v932, %v956
        %v973 = vmul.f32 %v933, %v971
        %974 = vrot.lane.b32.xlu0 %v972, 1
        %v975 = vpop.permute.xlu0 %974
        %976 = vrot.lane.b32.xlu0 %v973, 1
        %v977 = vpop.permute.xlu0 %976
        %v978 = vmul.f32 %v975, %v541
        %v979 = vmul.f32 %v977, %v541
        %980 = vrot.lane.b32.xlu0 %v972, 127
        %v981 = vpop.permute.xlu0 %980
        %982 = vrot.lane.b32.xlu0 %v973, 127
        %v983 = vpop.permute.xlu0 %982
        %v984 = vmul.f32 %v981, %v544
        %v985 = vmul.f32 %v983, %v544
        %987 = vset.pattern.permute.xlu0 0
        %988 = vperm.xlu0 %987, %v562
        %v989 = vpop.permute.xlu0 %988
        %992 = vset.pattern.permute.xlu0 0
        %993 = vperm.xlu0 %992, %v563
        %v994 = vpop.permute.xlu0 %993
        %vm996 = vcmask 392192
        %v998 = vsel %vm996, %v560, 0
        %v1001 = vsel %vm996, %v561, 0
        %1003 = vmatpush.msra.mxu0 0.0
        %1004 = vmatpush.msra.mxu0 0.0
        %1005 = vmatpush.msra.mxu0 0.0
        %1006 = vmatpush.msra.mxu0 0.0
        %1007 = vmatpush.msra.mxu0 0.0
        %1008 = vmatpush.msra.mxu0 0.0
        %1009 = vmatpush.msra.mxu0 0.0
        %1010 = vmatpush.msra.mxu0 0.0
        %1011 = vmatpush.msra.mxu0 0.0
        %1012 = vmatpush.msra.mxu0 0.0
        %1013 = vmatpush.msra.mxu0 %v985
        %1014 = vmatpush.msra.mxu0 %v984
        %1015 = vmatpush.msra.mxu0 %v973
        %1016 = vmatpush.msra.mxu0 %v972
        %1017 = vmatpush.msra.mxu0 %v979
        %1018 = vmatpush.msra.mxu0 %v978
        %1019 = vmatmul.f32.gmra.mxu0 %v998
        %v1020 = vpop.f32.mrf.mxu0
        %v1021 = vadd.f32 %v989, %v1020
        %1022 = vmatmul.f32.gmra.mxu0 %v1001
        %v1023 = vpop.f32.mrf.mxu0
        %v1024 = vadd.f32 %v994, %v1023
        %1025 = vdwg.mxu0
        %1027 = vset.pattern.permute.xlu0 0
        %1028 = vperm.xlu0 %1027, %v566
        %v1029 = vpop.permute.xlu0 %1028
        %1032 = vset.pattern.permute.xlu0 0
        %1033 = vperm.xlu0 %1032, %v567
        %v1034 = vpop.permute.xlu0 %1033
        %v1037 = vsel %vm569, %v564, 0
        %v1040 = vsel %vm569, %v565, 0
        %1042 = vmatpush.msra.mxu0 0.0
        %1043 = vmatpush.msra.mxu0 0.0
        %1044 = vmatpush.msra.mxu0 0.0
        %1045 = vmatpush.msra.mxu0 0.0
        %1046 = vmatpush.msra.mxu0 0.0
        %1047 = vmatpush.msra.mxu0 0.0
        %1048 = vmatpush.msra.mxu0 0.0
        %1049 = vmatpush.msra.mxu0 0.0
        %1050 = vmatpush.msra.mxu0 0.0
        %1051 = vmatpush.msra.mxu0 0.0
        %1052 = vmatpush.msra.mxu0 0.0
        %1053 = vmatpush.msra.mxu0 0.0
        %1054 = vmatpush.msra.mxu0 0.0
        %1055 = vmatpush.msra.mxu0 0.0
        %1056 = vmatpush.msra.mxu0 0.0
        %1057 = vmatpush.msra.mxu0 %v568
        %1058 = vmatmul.f32.gmra.mxu0 %v1037
        %v1059 = vpop.f32.mrf.mxu0
        %v1060 = vadd.f32 %v1029, %v1059
        %1061 = vmatmul.f32.gmra.mxu0 %v1040
        %v1062 = vpop.f32.mrf.mxu0
        %v1063 = vadd.f32 %v1034, %v1062
        %1064 = vdwg.mxu0
        %v1065 = vadd.f32 %v1021, %v1060
        %v1066 = vadd.f32 %v1024, %v1063
        %1067 = vst [vmem:[%s527] sm:$0xff] %v1065
        %1068 = vst [vmem:[%s527 + $0x8] sm:$0xff] %v1066
        %s1069 = sand.u32 %s384, 1
        %s1070 = scalar_lea.sflag [#allocation3], %s1069
        %s1071 = sand.u32 %s384, 1
        %s1072 = smul.addr %s1071, 16
        %s1073 = scalar_lea.vmem [#allocation2], %s1072
        // Predicated region
        $region85: #{tpu_custom_call.1} parent=83 // pred_check
          %p1074 = pneg %p394
        $region86: #{tpu_custom_call.1} parent=83 // pred_check_branch
          %1076 = sbr.rel (%p1074) target = $region88
        $region87: #{tpu_custom_call.1} parent=83 // pred_region
          %1078 = vsyncadd %s1070, 0
          %s1079 = smul.addr %s30, 2
          %s1080 = smul.addr %s1079, 8
          %s1081 = scalar_lea.hbm %s16, %s1080
          %s1082 = sshll.u32 %s1073, 4
          %s1083 = int_to_ptr.vmem [resolvable:$true] %s1082
          %s1084 = sshll.u32 %s1081, 4
          %s1085 = int_to_ptr.hbm [resolvable:$true] %s1084
          %1090 = dma.vmem_to_hbm [thread:$0]  %s1083, 256, %s1085, %s1070, 128, 128, 8
        $region88: #{tpu_custom_call.1} parent=83 // pred_fallthru
          _
      $region84: #{tpu_custom_call.1} parent=5 // pred_fallthru
        _
      %p1091 = scmp.le.s32.totalorder 2, %s25
      // Predicated region
      $region89: #{tpu_custom_call.1} parent=5 // pred_check
        %p1092 = pneg %p1091
      $region90: #{tpu_custom_call.1} parent=5 // pred_check_branch
        %1094 = sbr.rel (%p1092) target = $region92
      $region91: #{tpu_custom_call.1} parent=5 // pred_region
        %s1095 = ssub.s32 %s25, 2
        // Predicated region
        $region93: #{tpu_custom_call.1} parent=91 // pred_check
          %p1096 = pneg %p400
        $region94: #{tpu_custom_call.1} parent=91 // pred_check_branch
          %1098 = sbr.rel (%p1096) target = $region96
        $region95: #{tpu_custom_call.1} parent=91 // pred_region
          %s1099 = sand.u32 %s385, 1
          %s1100 = scalar_lea.sflag [#allocation3], %s1099
          %s1101 = sand.u32 %s385, 1
          %s1102 = smul.addr %s1101, 16
          %s1103 = scalar_lea.vmem [#allocation2], %s1102
          %1105 = dma.done %s1100, 256
        $region96: #{tpu_custom_call.1} parent=91 // pred_fallthru
          _
      $region92: #{tpu_custom_call.1} parent=5 // pred_fallthru
        _
    $region6: #{tpu_custom_call.1} parent=1 // loop_footer
      %s29 = sadd.s32 1, %s25
    $region7: #{tpu_custom_call.1} parent=1 // loop_footer_branch
      %24 = sbr.rel target = $region3
    $region8: #{tpu_custom_call.1} parent=1 // loop_exit
      _
    %1106 = vsyncpa [#allocation3], 1
    %s1107 = scalar_lea.sflag [#allocation3], 1
    %1108 = vsyncpa %s1107, 1

</llo_original>
